<compile_context>
chip_gen: v6e
topology: v6e:2x2x1
jax: 0.10.0
libtpu: 0.0.40
codegen_flags: <defaults>
</compile_context>

<pallas_src>
import functools
import math

import numpy as np

import jax
import jax.numpy as jnp
from jax import lax
from jax.experimental import pallas as pl
from jax.experimental.pallas import tpu as pltpu


def _round_up(x, m):
    return ((x + m - 1) // m) * m


def _rbf_kernel(x_ref, par_ref, o_ref):
    # x_ref:   (BR, P)    packed block of flattened inputs (P scalars / row)
    # par_ref: (2, P*D)   row 0: offsets tiled P times, row 1: -0.5/width^2 tiled
    # o_ref:   (BR, P*D)  lane-dense packed output block
    x = x_ref[...]
    br, p = x.shape
    dpk = o_ref.shape[-1]
    d = dpk // p

    # Spread column i of x across its D-lane slice: xb[r, i*D + j] = x[r, i].
    # Running threshold-select on the lane index (no divide).  For the default
    # D=64 (P=2) this is one iota + one compare + one select per output vreg.
    # TODO(synk): on v7x consider replacing this with a single MXU matmul
    # against a constant 0/1 selection matrix to stay purely HBM-write-bound.
    xb = jnp.broadcast_to(x[:, 0:1], (br, dpk))
    if p > 1:
        lane = lax.broadcasted_iota(jnp.int32, (br, dpk), 1)
        for i in range(1, p):
            xb = jnp.where(lane >= i * d, x[:, i:i + 1], xb)

    diff = xb - par_ref[0:1, :]
    o_ref[...] = jnp.exp(par_ref[1:2, :] * (diff * diff)).astype(o_ref.dtype)


@functools.partial(jax.jit, static_argnames=("block_rows", "out_dtype"))
def rbf_forward(inputs, offsets, widths, *, block_rows=8192, out_dtype=jnp.float32):
    """Pallas RBF expansion: returns an array of shape inputs.shape + (dimension,)."""
    orig_shape = inputs.shape
    dim = offsets.shape[-1]

    off = offsets.reshape(dim).astype(jnp.float32)
    coeff = -0.5 / jnp.square(widths.reshape(dim).astype(jnp.float32))

    x = inputs.reshape(-1).astype(jnp.float32)
    n = x.shape[0]

    # Lane packing so pack * dim is a multiple of 128 (unmasked, full-lane
    # stores).  pack = lcm(dim, 128) / dim; cap the packed-row width.
    pack = 128 // math.gcd(dim, 128)
    if pack * dim > 4096:
        pack = 1  # rare fallback: accepts masked stores for pathological D
    dpk = pack * dim

    n_main = (n // pack) * pack
    rows = n_main // pack
    leftover = n - n_main

    def _tail(x_tail):
        # Tiny pure-JAX path for <= pack-1 leftover scalars (or n < pack).
        return jnp.exp(coeff * jnp.square(x_tail[:, None] - off)).astype(out_dtype)

    if rows == 0:
        return _tail(x).reshape(orig_shape + (dim,))

    x2d = (x if leftover == 0 else x[:n_main]).reshape(rows, pack)

    # Fused constant operand: offsets and coefficient, each tiled `pack` times.
    par = jnp.stack([jnp.tile(off, pack), jnp.tile(coeff, pack)], axis=0)  # (2, dpk)

    # VMEM budget.  The (br, pack) input tile is lane-padded to 128 lanes in
    # VMEM, so it costs as much as a 128-lane tile; both input and output
    # tiles are double-buffered by the BlockSpec pipeline.
    out_bytes = jnp.dtype(out_dtype).itemsize
    per_row = 2 * (_round_up(pack, 128) * 4 + _round_up(dpk, 128) * out_bytes)
    budget = 40 << 20  # safe on v5e/v6e (128 MiB) and v7x (64 MiB per TC)
    br_cap = max(8, ((budget // per_row) // 8) * 8)
    br = min(block_rows, br_cap, _round_up(rows, 8))
    vmem_limit = int(min(max(per_row * br + (4 << 20), 16 << 20), 48 << 20))

    grid = (pl.cdiv(rows, br),)

    out = pl.pallas_call(
        _rbf_kernel,
        out_shape=jax.ShapeDtypeStruct((rows, dpk), out_dtype),
        grid_spec=pltpu.PrefetchScalarGridSpec(
            num_scalar_prefetch=0,
            grid=grid,
            in_specs=[
                pl.BlockSpec((br, pack), lambda i: (i, 0)),
                pl.BlockSpec((2, dpk), lambda i: (0, 0)),
            ],
            out_specs=pl.BlockSpec((br, dpk), lambda i: (i, 0)),
        ),
        compiler_params=pltpu.CompilerParams(
            # Rows are independent -> megacore / multi-TC sharding.
            # TODO(synk): verify true 2-TC sharding on v7x; if not, switch this
            # grid axis to pltpu.CORE_PARALLEL.
            dimension_semantics=("parallel",),
            vmem_limit_bytes=vmem_limit,
        ),
    )(x2d, par)

    flat = out.reshape(n_main, dim)  # free row-major view of the packed output
    if leftover:
        # <= pack-1 scalars handled in plain JAX; no full-output slice copy.
        flat = jnp.concatenate([flat, _tail(x[n_main:])], axis=0)
    return flat.reshape(orig_shape + (dim,))


def make_rbf_params(dimension=64, init_max_distance=10.0):
    """Deterministic parameter init matching the PyTorch module __init__."""
    offsets = jnp.linspace(0.0, init_max_distance, dimension, dtype=jnp.float32)
    widths = jnp.full((dimension,), init_max_distance / dimension, dtype=jnp.float32)
    return offsets, widths


if __name__ == "__main__":
    dimension = 64
    init_max_distance = 10.0
    offsets, widths = make_rbf_params(dimension, init_max_distance)

    key = jax.random.PRNGKey(0)
    k0, k1, k2 = jax.random.split(key, 3)

    x = jax.random.uniform(k0, (2, 4, 16, 16), dtype=jnp.float32,
                           minval=0.0, maxval=init_max_distance)

    y = rbf_forward(x, offsets, widths)
    jax.block_until_ready(y)

    # Reference (pure JAX, same math as the PyTorch forward).
    coeff = -0.5 / (widths ** 2)
    y_ref = jnp.exp(coeff * (x[..., None] - offsets) ** 2)
    assert y.shape == x.shape + (dimension,)
    assert jnp.allclose(y, y_ref, atol=1e-6, rtol=1e-6)

    # Ragged path: flattened size odd -> aligned-prefix kernel + JAX tail.
    x_odd = jax.random.uniform(k1, (3, 5, 7), dtype=jnp.float32,
                               minval=0.0, maxval=init_max_distance)
    y_odd = rbf_forward(x_odd, offsets, widths)
    y_odd_ref = jnp.exp(coeff * (x_odd[..., None] - offsets) ** 2)
    assert y_odd.shape == x_odd.shape + (dimension,)
    assert jnp.allclose(y_odd, y_odd_ref, atol=1e-6, rtol=1e-6)

    # bf16 fast-path output (halves HBM writes on the write-bound kernel).
    y_bf16 = rbf_forward(x, offsets, widths, out_dtype=jnp.bfloat16)
    assert y_bf16.dtype == jnp.bfloat16 and y_bf16.shape == y_ref.shape
    assert jnp.allclose(y_bf16.astype(jnp.float32), y_ref, atol=1e-2, rtol=2e-2)

    # Generalized packing: D = 96 (not a divisor of 128) -> pack = 4, 384 lanes.
    off96 = jnp.linspace(0.0, init_max_distance, 96, dtype=jnp.float32)
    wid96 = jnp.full((96,), init_max_distance / 96, dtype=jnp.float32)
    x96 = jax.random.uniform(k2, (4, 8), dtype=jnp.float32,
                             minval=0.0, maxval=init_max_distance)
    y96 = rbf_forward(x96, off96, wid96)
    y96_ref = jnp.exp((-0.5 / (wid96 ** 2)) * (x96[..., None] - off96) ** 2)
    assert y96.shape == x96.shape + (96,)
    assert jnp.allclose(y96, y96_ref, atol=1e-6, rtol=1e-6)

    jax.block_until_ready((y, y_odd, y_bf16, y96))
    print("KERNEL_OK")
</pallas_src>

<mosaic_0001>
module attributes {stable_mosaic.version = 11 : i64} {
  func.func @_rbf_kernel(%arg0: i32, %arg1: memref<1024x2xf32, #tpu.memory_space<vmem>>, %arg2: memref<2x128xf32, #tpu.memory_space<vmem>>, %arg3: memref<1024x128xf32, #tpu.memory_space<vmem>>) attributes {dimension_semantics = [#tpu.dimension_semantics<parallel>], iteration_bounds = array<i64: 1>, scalar_prefetch = 0 : i64, scratch_operands = 0 : i64, tpu.core_type = #tpu.core_type<tc>, window_params = [{transform_indices = @transform_0, window_bounds = array<i64: 1024, 2>}, {pipeline_mode = #tpu.pipeline_mode<synchronous>, transform_indices = @transform_1, window_bounds = array<i64: 2, 128>}, {transform_indices = @transform_2, window_bounds = array<i64: 1024, 128>}]} {
    %c0 = arith.constant 0 : index
    %c0_0 = arith.constant 0 : index
    %0 = vector.load %arg1[%c0, %c0_0] : memref<1024x2xf32, #tpu.memory_space<vmem>>, vector<1024x2xf32>
    %1 = vector.extract_strided_slice %0 {offsets = [0, 0], sizes = [1024, 1], strides = [1, 1]} : vector<1024x2xf32> to vector<1024x1xf32>
    %2 = vector.shape_cast %1 : vector<1024x1xf32> to vector<1024x1xf32>
    %3 = vector.broadcast %2 : vector<1024x1xf32> to vector<1024x128xf32>
    %4 = tpu.iota {dimensions = array<i32: 1>} : vector<1024x128xi32>
    %c64_i32 = arith.constant 64 : i32
    %5 = vector.broadcast %c64_i32 : i32 to vector<1024x128xi32>
    %6 = arith.cmpi sge, %4, %5 : vector<1024x128xi32>
    %7 = vector.extract_strided_slice %0 {offsets = [0, 1], sizes = [1024, 1], strides = [1, 1]} : vector<1024x2xf32> to vector<1024x1xf32>
    %8 = vector.shape_cast %7 : vector<1024x1xf32> to vector<1024x1xf32>
    %9 = vector.broadcast %8 : vector<1024x1xf32> to vector<1024x128xf32>
    %10 = arith.select %6, %9, %3 : vector<1024x128xi1>, vector<1024x128xf32>
    %c0_1 = arith.constant 0 : index
    %c0_2 = arith.constant 0 : index
    %11 = vector.load %arg2[%c0_1, %c0_2] : memref<2x128xf32, #tpu.memory_space<vmem>>, vector<1x128xf32>
    %12 = vector.broadcast %11 : vector<1x128xf32> to vector<1024x128xf32>
    %13 = arith.subf %10, %12 : vector<1024x128xf32>
    %c1 = arith.constant 1 : index
    %c0_3 = arith.constant 0 : index
    %14 = vector.load %arg2[%c1, %c0_3] : memref<2x128xf32, #tpu.memory_space<vmem>>, vector<1x128xf32>
    %15 = arith.mulf %13, %13 : vector<1024x128xf32>
    %16 = vector.broadcast %14 : vector<1x128xf32> to vector<1024x128xf32>
    %17 = arith.mulf %16, %15 : vector<1024x128xf32>
    %18 = math.exp %17 : vector<1024x128xf32>
    %c0_4 = arith.constant 0 : index
    %c0_5 = arith.constant 0 : index
    %19 = vector.load %arg3[%c0_4, %c0_5] : memref<1024x128xf32, #tpu.memory_space<vmem>>, vector<1024x128xf32>
    tpu.vector_store %arg3[%c0_4, %c0_5], %18 {strides = array<i32>} : memref<1024x128xf32, #tpu.memory_space<vmem>>, vector<1024x128xf32>,
    return
  }
  func.func @transform_0(%arg0: i32) -> (i32, i32) {
    %c0_i32 = arith.constant 0 : i32
    %c0_i32_0 = arith.constant 0 : i32
    return %arg0, %c0_i32 : i32, i32
  }
  func.func @transform_1(%arg0: i32) -> (i32, i32) {
    %c0_i32 = arith.constant 0 : i32
    %c0_i32_0 = arith.constant 0 : i32
    %c0_i32_1 = arith.constant 0 : i32
    return %c0_i32, %c0_i32_0 : i32, i32
  }
  func.func @transform_2(%arg0: i32) -> (i32, i32) {
    %c0_i32 = arith.constant 0 : i32
    %c0_i32_0 = arith.constant 0 : i32
    return %arg0, %c0_i32 : i32, i32
  }
}

</mosaic_0001>

<llo_original>
// kernel: tile.19
$region0: #{tile.19}
  %s0 = inlined_call_operand.vmem [shape: f32[2,64], index: 0, kind: input, shape index: {}]
  %s1 = inlined_call_operand.vmem [shape: f32[1,128], index: 1, kind: output, shape index: {}]
  $region1: #{tile.19} parent=0
    #allocation0 [shape = 'u8[4096]{0}', space=vmem, size = 0x1000, scoped, tag = 'scoped mem for output reshape']
    #allocation1 [shape = 'u8[4096]{0}', space=vmem, size = 0x1000, scoped, tag = 'scoped mem for input reshape']
    %s3 = sshll.u32 1, 2
    %s4 = ssub.s32 %s3, 1
    %v5 = vld [vmem:[%s0] sm:%s4]
    %6 = vst [vmem:[#allocation1] sm:%s4] %v5
    %v7 = vld [vmem:[#allocation1] sm:$0x1]
    %vm8 = vcmask 523264
    %9 = vst.msk [vmem:[#allocation0] sm:$0x1] %vm8, %v7
    %s10 = scalar_lea.vmem [#allocation1], 1
    %v11 = vld [vmem:[%s10] sm:$0x1]
    %12 = vrot.lane.b32.xlu0 %v11, 64
    %v13 = vpop.permute.xlu0 %12
    %vm14 = vcmask 1048064
    %15 = vst.msk [vmem:[#allocation0] sm:$0x1] %vm14, %v13
    %s17 = sshll.u32 1, 1
    %s18 = ssub.s32 %s17, 1
    %v20 = vld [vmem:[#allocation0] sm:%s18]
    %s21 = sshll.u32 1, 1
    %s22 = ssub.s32 %s21, 1
    %23 = vst [vmem:[%s1] sm:%s22] %v20

// kernel: tile.17
$region0: #{tile.17}
  #allocation0 [shape = 's32[1]{0}', space=sflag, size = 0x4, scoped, tag = 'scoped memory for tile.17']
  %s0 = inlined_call_operand.vmem [shape: f32[64], index: 0, kind: input, shape index: {}]
  %s1 = inlined_call_operand.vmem [shape: f32[2,64], index: 1, kind: output, shape index: {}]
  // Predicated region
  $region2: #{tile.17} parent=0 // pred_check
    _
  $region3: #{tile.17} parent=0 // pred_check_branch
    %3 = sbr.rel (0) target = $region5
  $region4: #{tile.17} parent=0 // pred_region
    _
  $region5: #{tile.17} parent=0 // pred_fallthru
    _
  %v4 = vld [vmem:[%s0] ss:$0 sm:$0xff]
  %5 = vst [vmem:[%s1] sm:$0x3] %v4

// kernel: rbf_forward.1
$region0: #{rbf_forward.1}
  #allocation0 [shape = 'u32[]', space=smem, size = 0x4, offset = 0x4, fixed_abs, tag = 'smem constant byte address 0x4 - core index']
  #allocation1 [shape = 'u32[144,128]{1,0:T(1,128)}', space=vmem, size = 0x12000, scoped, tag = 'internal scratch']
  %s0 = inlined_call_operand.vmem [shape: f32[1024,2], index: 0, kind: input, shape index: {}]
  %s1 = inlined_call_operand.vmem [shape: f32[2,128], index: 1, kind: input, shape index: {}]
  %s2 = inlined_call_operand.vmem [shape: f32[1024,128], index: 2, kind: output, shape index: {}]
  %s3 = sld [smem:[#allocation0]]
  $region18: #{rbf_forward.1} parent=0
    _
  %s5 = ssub.s32 1, %s3
  %s6 = scalar_select 0, %s5, %s3
  // Predicated region
  $region2: #{rbf_forward.1} parent=0 // pred_check
    _
  $region3: #{rbf_forward.1} parent=0 // pred_check_branch
    %8 = sbr.rel (0) target = $region5
  $region4: #{rbf_forward.1} parent=0 // pred_region
    _
  $region5: #{rbf_forward.1} parent=0 // pred_fallthru
    _
  // Predicated region
  $region6: #{rbf_forward.1} parent=0 // pred_check
    _
  $region7: #{rbf_forward.1} parent=0 // pred_check_branch
    %10 = sbr.rel (0) target = $region9
  $region8: #{rbf_forward.1} parent=0 // pred_region
    _
  $region9: #{rbf_forward.1} parent=0 // pred_fallthru
    _
  %v11 = vld [vmem:[%s0] sm:$0xff]
  %v12 = vld [vmem:[%s0 + $0x8] sm:$0xff]
  %v13 = vld [vmem:[%s0 + $0x10] sm:$0xff]
  %v14 = vld [vmem:[%s0 + $0x18] sm:$0xff]
  %v15 = vld [vmem:[%s0 + $0x20] sm:$0xff]
  %v16 = vld [vmem:[%s0 + $0x28] sm:$0xff]
  %v17 = vld [vmem:[%s0 + $0x30] sm:$0xff]
  %v18 = vld [vmem:[%s0 + $0x38] sm:$0xff]
  %v19 = vld [vmem:[%s0 + $0x40] sm:$0xff]
  %v20 = vld [vmem:[%s0 + $0x48] sm:$0xff]
  %v21 = vld [vmem:[%s0 + $0x50] sm:$0xff]
  %v22 = vld [vmem:[%s0 + $0x58] sm:$0xff]
  %v23 = vld [vmem:[%s0 + $0x60] sm:$0xff]
  %v24 = vld [vmem:[%s0 + $0x68] sm:$0xff]
  %v25 = vld [vmem:[%s0 + $0x70] sm:$0xff]
  %v26 = vld [vmem:[%s0 + $0x78] sm:$0xff]
  %v27 = vld [vmem:[%s0 + $0x80] sm:$0xff]
  %v28 = vld [vmem:[%s0 + $0x88] sm:$0xff]
  %v29 = vld [vmem:[%s0 + $0x90] sm:$0xff]
  %v30 = vld [vmem:[%s0 + $0x98] sm:$0xff]
  %v31 = vld [vmem:[%s0 + $0xa0] sm:$0xff]
  %v32 = vld [vmem:[%s0 + $0xa8] sm:$0xff]
  %v33 = vld [vmem:[%s0 + $0xb0] sm:$0xff]
  %v34 = vld [vmem:[%s0 + $0xb8] sm:$0xff]
  %v35 = vld [vmem:[%s0 + $0xc0] sm:$0xff]
  %v36 = vld [vmem:[%s0 + $0xc8] sm:$0xff]
  %v37 = vld [vmem:[%s0 + $0xd0] sm:$0xff]
  %v38 = vld [vmem:[%s0 + $0xd8] sm:$0xff]
  %v39 = vld [vmem:[%s0 + $0xe0] sm:$0xff]
  %v40 = vld [vmem:[%s0 + $0xe8] sm:$0xff]
  %v41 = vld [vmem:[%s0 + $0xf0] sm:$0xff]
  %v42 = vld [vmem:[%s0 + $0xf8] sm:$0xff]
  %v43 = vld [vmem:[%s0 + $0x100] sm:$0xff]
  %v44 = vld [vmem:[%s0 + $0x108] sm:$0xff]
  %v45 = vld [vmem:[%s0 + $0x110] sm:$0xff]
  %v46 = vld [vmem:[%s0 + $0x118] sm:$0xff]
  %v47 = vld [vmem:[%s0 + $0x120] sm:$0xff]
  %v48 = vld [vmem:[%s0 + $0x128] sm:$0xff]
  %v49 = vld [vmem:[%s0 + $0x130] sm:$0xff]
  %v50 = vld [vmem:[%s0 + $0x138] sm:$0xff]
  %v51 = vld [vmem:[%s0 + $0x140] sm:$0xff]
  %v52 = vld [vmem:[%s0 + $0x148] sm:$0xff]
  %v53 = vld [vmem:[%s0 + $0x150] sm:$0xff]
  %v54 = vld [vmem:[%s0 + $0x158] sm:$0xff]
  %v55 = vld [vmem:[%s0 + $0x160] sm:$0xff]
  %v56 = vld [vmem:[%s0 + $0x168] sm:$0xff]
  %v57 = vld [vmem:[%s0 + $0x170] sm:$0xff]
  %v58 = vld [vmem:[%s0 + $0x178] sm:$0xff]
  %v59 = vld [vmem:[%s0 + $0x180] sm:$0xff]
  %v60 = vld [vmem:[%s0 + $0x188] sm:$0xff]
  %v61 = vld [vmem:[%s0 + $0x190] sm:$0xff]
  %v62 = vld [vmem:[%s0 + $0x198] sm:$0xff]
  %v63 = vld [vmem:[%s0 + $0x1a0] sm:$0xff]
  %v64 = vld [vmem:[%s0 + $0x1a8] sm:$0xff]
  %v65 = vld [vmem:[%s0 + $0x1b0] sm:$0xff]
  %v66 = vld [vmem:[%s0 + $0x1b8] sm:$0xff]
  %v67 = vld [vmem:[%s0 + $0x1c0] sm:$0xff]
  %v68 = vld [vmem:[%s0 + $0x1c8] sm:$0xff]
  %v69 = vld [vmem:[%s0 + $0x1d0] sm:$0xff]
  %v70 = vld [vmem:[%s0 + $0x1d8] sm:$0xff]
  %v71 = vld [vmem:[%s0 + $0x1e0] sm:$0xff]
  %v72 = vld [vmem:[%s0 + $0x1e8] sm:$0xff]
  %v73 = vld [vmem:[%s0 + $0x1f0] sm:$0xff]
  %v74 = vld [vmem:[%s0 + $0x1f8] sm:$0xff]
  %v75 = vld [vmem:[%s0 + $0x200] sm:$0xff]
  %v76 = vld [vmem:[%s0 + $0x208] sm:$0xff]
  %v77 = vld [vmem:[%s0 + $0x210] sm:$0xff]
  %v78 = vld [vmem:[%s0 + $0x218] sm:$0xff]
  %v79 = vld [vmem:[%s0 + $0x220] sm:$0xff]
  %v80 = vld [vmem:[%s0 + $0x228] sm:$0xff]
  %v81 = vld [vmem:[%s0 + $0x230] sm:$0xff]
  %v82 = vld [vmem:[%s0 + $0x238] sm:$0xff]
  %v83 = vld [vmem:[%s0 + $0x240] sm:$0xff]
  %v84 = vld [vmem:[%s0 + $0x248] sm:$0xff]
  %v85 = vld [vmem:[%s0 + $0x250] sm:$0xff]
  %v86 = vld [vmem:[%s0 + $0x258] sm:$0xff]
  %v87 = vld [vmem:[%s0 + $0x260] sm:$0xff]
  %v88 = vld [vmem:[%s0 + $0x268] sm:$0xff]
  %v89 = vld [vmem:[%s0 + $0x270] sm:$0xff]
  %v90 = vld [vmem:[%s0 + $0x278] sm:$0xff]
  %v91 = vld [vmem:[%s0 + $0x280] sm:$0xff]
  %v92 = vld [vmem:[%s0 + $0x288] sm:$0xff]
  %v93 = vld [vmem:[%s0 + $0x290] sm:$0xff]
  %v94 = vld [vmem:[%s0 + $0x298] sm:$0xff]
  %v95 = vld [vmem:[%s0 + $0x2a0] sm:$0xff]
  %v96 = vld [vmem:[%s0 + $0x2a8] sm:$0xff]
  %v97 = vld [vmem:[%s0 + $0x2b0] sm:$0xff]
  %v98 = vld [vmem:[%s0 + $0x2b8] sm:$0xff]
  %v99 = vld [vmem:[%s0 + $0x2c0] sm:$0xff]
  %v100 = vld [vmem:[%s0 + $0x2c8] sm:$0xff]
  %v101 = vld [vmem:[%s0 + $0x2d0] sm:$0xff]
  %v102 = vld [vmem:[%s0 + $0x2d8] sm:$0xff]
  %v103 = vld [vmem:[%s0 + $0x2e0] sm:$0xff]
  %v104 = vld [vmem:[%s0 + $0x2e8] sm:$0xff]
  %v105 = vld [vmem:[%s0 + $0x2f0] sm:$0xff]
  %v106 = vld [vmem:[%s0 + $0x2f8] sm:$0xff]
  %v107 = vld [vmem:[%s0 + $0x300] sm:$0xff]
  %v108 = vld [vmem:[%s0 + $0x308] sm:$0xff]
  %v109 = vld [vmem:[%s0 + $0x310] sm:$0xff]
  %v110 = vld [vmem:[%s0 + $0x318] sm:$0xff]
  %v111 = vld [vmem:[%s0 + $0x320] sm:$0xff]
  %v112 = vld [vmem:[%s0 + $0x328] sm:$0xff]
  %v113 = vld [vmem:[%s0 + $0x330] sm:$0xff]
  %v114 = vld [vmem:[%s0 + $0x338] sm:$0xff]
  %v115 = vld [vmem:[%s0 + $0x340] sm:$0xff]
  %v116 = vld [vmem:[%s0 + $0x348] sm:$0xff]
  %v117 = vld [vmem:[%s0 + $0x350] sm:$0xff]
  %v118 = vld [vmem:[%s0 + $0x358] sm:$0xff]
  %v119 = vld [vmem:[%s0 + $0x360] sm:$0xff]
  %v120 = vld [vmem:[%s0 + $0x368] sm:$0xff]
  %v121 = vld [vmem:[%s0 + $0x370] sm:$0xff]
  %v122 = vld [vmem:[%s0 + $0x378] sm:$0xff]
  %v123 = vld [vmem:[%s0 + $0x380] sm:$0xff]
  %v124 = vld [vmem:[%s0 + $0x388] sm:$0xff]
  %v125 = vld [vmem:[%s0 + $0x390] sm:$0xff]
  %v126 = vld [vmem:[%s0 + $0x398] sm:$0xff]
  %v127 = vld [vmem:[%s0 + $0x3a0] sm:$0xff]
  %v128 = vld [vmem:[%s0 + $0x3a8] sm:$0xff]
  %v129 = vld [vmem:[%s0 + $0x3b0] sm:$0xff]
  %v130 = vld [vmem:[%s0 + $0x3b8] sm:$0xff]
  %v131 = vld [vmem:[%s0 + $0x3c0] sm:$0xff]
  %v132 = vld [vmem:[%s0 + $0x3c8] sm:$0xff]
  %v133 = vld [vmem:[%s0 + $0x3d0] sm:$0xff]
  %v134 = vld [vmem:[%s0 + $0x3d8] sm:$0xff]
  %v135 = vld [vmem:[%s0 + $0x3e0] sm:$0xff]
  %v136 = vld [vmem:[%s0 + $0x3e8] sm:$0xff]
  %v137 = vld [vmem:[%s0 + $0x3f0] sm:$0xff]
  %v138 = vld [vmem:[%s0 + $0x3f8] sm:$0xff]
  %140 = vset.pattern.permute.xlu0 0
  %141 = vperm.xlu0 %140, %v11
  %v142 = vpop.permute.xlu0 %141
  %145 = vset.pattern.permute.xlu0 0
  %146 = vperm.xlu0 %145, %v12
  %v147 = vpop.permute.xlu0 %146
  %150 = vset.pattern.permute.xlu0 0
  %151 = vperm.xlu0 %150, %v13
  %v152 = vpop.permute.xlu0 %151
  %155 = vset.pattern.permute.xlu0 0
  %156 = vperm.xlu0 %155, %v14
  %v157 = vpop.permute.xlu0 %156
  %160 = vset.pattern.permute.xlu0 0
  %161 = vperm.xlu0 %160, %v15
  %v162 = vpop.permute.xlu0 %161
  %165 = vset.pattern.permute.xlu0 0
  %166 = vperm.xlu0 %165, %v16
  %v167 = vpop.permute.xlu0 %166
  %170 = vset.pattern.permute.xlu0 0
  %171 = vperm.xlu0 %170, %v17
  %v172 = vpop.permute.xlu0 %171
  %175 = vset.pattern.permute.xlu0 0
  %176 = vperm.xlu0 %175, %v18
  %v177 = vpop.permute.xlu0 %176
  %180 = vset.pattern.permute.xlu0 0
  %181 = vperm.xlu0 %180, %v19
  %v182 = vpop.permute.xlu0 %181
  %185 = vset.pattern.permute.xlu0 0
  %186 = vperm.xlu0 %185, %v20
  %v187 = vpop.permute.xlu0 %186
  %190 = vset.pattern.permute.xlu0 0
  %191 = vperm.xlu0 %190, %v21
  %v192 = vpop.permute.xlu0 %191
  %195 = vset.pattern.permute.xlu0 0
  %196 = vperm.xlu0 %195, %v22
  %v197 = vpop.permute.xlu0 %196
  %200 = vset.pattern.permute.xlu0 0
  %201 = vperm.xlu0 %200, %v23
  %v202 = vpop.permute.xlu0 %201
  %205 = vset.pattern.permute.xlu0 0
  %206 = vperm.xlu0 %205, %v24
  %v207 = vpop.permute.xlu0 %206
  %210 = vset.pattern.permute.xlu0 0
  %211 = vperm.xlu0 %210, %v25
  %v212 = vpop.permute.xlu0 %211
  %215 = vset.pattern.permute.xlu0 0
  %216 = vperm.xlu0 %215, %v26
  %v217 = vpop.permute.xlu0 %216
  %220 = vset.pattern.permute.xlu0 0
  %221 = vperm.xlu0 %220, %v27
  %v222 = vpop.permute.xlu0 %221
  %225 = vset.pattern.permute.xlu0 0
  %226 = vperm.xlu0 %225, %v28
  %v227 = vpop.permute.xlu0 %226
  %230 = vset.pattern.permute.xlu0 0
  %231 = vperm.xlu0 %230, %v29
  %v232 = vpop.permute.xlu0 %231
  %235 = vset.pattern.permute.xlu0 0
  %236 = vperm.xlu0 %235, %v30
  %v237 = vpop.permute.xlu0 %236
  %240 = vset.pattern.permute.xlu0 0
  %241 = vperm.xlu0 %240, %v31
  %v242 = vpop.permute.xlu0 %241
  %245 = vset.pattern.permute.xlu0 0
  %246 = vperm.xlu0 %245, %v32
  %v247 = vpop.permute.xlu0 %246
  %250 = vset.pattern.permute.xlu0 0
  %251 = vperm.xlu0 %250, %v33
  %v252 = vpop.permute.xlu0 %251
  %255 = vset.pattern.permute.xlu0 0
  %256 = vperm.xlu0 %255, %v34
  %v257 = vpop.permute.xlu0 %256
  %260 = vset.pattern.permute.xlu0 0
  %261 = vperm.xlu0 %260, %v35
  %v262 = vpop.permute.xlu0 %261
  %265 = vset.pattern.permute.xlu0 0
  %266 = vperm.xlu0 %265, %v36
  %v267 = vpop.permute.xlu0 %266
  %270 = vset.pattern.permute.xlu0 0
  %271 = vperm.xlu0 %270, %v37
  %v272 = vpop.permute.xlu0 %271
  %275 = vset.pattern.permute.xlu0 0
  %276 = vperm.xlu0 %275, %v38
  %v277 = vpop.permute.xlu0 %276
  %280 = vset.pattern.permute.xlu0 0
  %281 = vperm.xlu0 %280, %v39
  %v282 = vpop.permute.xlu0 %281
  %285 = vset.pattern.permute.xlu0 0
  %286 = vperm.xlu0 %285, %v40
  %v287 = vpop.permute.xlu0 %286
  %290 = vset.pattern.permute.xlu0 0
  %291 = vperm.xlu0 %290, %v41
  %v292 = vpop.permute.xlu0 %291
  %295 = vset.pattern.permute.xlu0 0
  %296 = vperm.xlu0 %295, %v42
  %v297 = vpop.permute.xlu0 %296
  %300 = vset.pattern.permute.xlu0 0
  %301 = vperm.xlu0 %300, %v43
  %v302 = vpop.permute.xlu0 %301
  %305 = vset.pattern.permute.xlu0 0
  %306 = vperm.xlu0 %305, %v44
  %v307 = vpop.permute.xlu0 %306
  %310 = vset.pattern.permute.xlu0 0
  %311 = vperm.xlu0 %310, %v45
  %v312 = vpop.permute.xlu0 %311
  %315 = vset.pattern.permute.xlu0 0
  %316 = vperm.xlu0 %315, %v46
  %v317 = vpop.permute.xlu0 %316
  %320 = vset.pattern.permute.xlu0 0
  %321 = vperm.xlu0 %320, %v47
  %v322 = vpop.permute.xlu0 %321
  %325 = vset.pattern.permute.xlu0 0
  %326 = vperm.xlu0 %325, %v48
  %v327 = vpop.permute.xlu0 %326
  %330 = vset.pattern.permute.xlu0 0
  %331 = vperm.xlu0 %330, %v49
  %v332 = vpop.permute.xlu0 %331
  %335 = vset.pattern.permute.xlu0 0
  %336 = vperm.xlu0 %335, %v50
  %v337 = vpop.permute.xlu0 %336
  %340 = vset.pattern.permute.xlu0 0
  %341 = vperm.xlu0 %340, %v51
  %v342 = vpop.permute.xlu0 %341
  %345 = vset.pattern.permute.xlu0 0
  %346 = vperm.xlu0 %345, %v52
  %v347 = vpop.permute.xlu0 %346
  %350 = vset.pattern.permute.xlu0 0
  %351 = vperm.xlu0 %350, %v53
  %v352 = vpop.permute.xlu0 %351
  %355 = vset.pattern.permute.xlu0 0
  %356 = vperm.xlu0 %355, %v54
  %v357 = vpop.permute.xlu0 %356
  %360 = vset.pattern.permute.xlu0 0
  %361 = vperm.xlu0 %360, %v55
  %v362 = vpop.permute.xlu0 %361
  %365 = vset.pattern.permute.xlu0 0
  %366 = vperm.xlu0 %365, %v56
  %v367 = vpop.permute.xlu0 %366
  %370 = vset.pattern.permute.xlu0 0
  %371 = vperm.xlu0 %370, %v57
  %v372 = vpop.permute.xlu0 %371
  %375 = vset.pattern.permute.xlu0 0
  %376 = vperm.xlu0 %375, %v58
  %v377 = vpop.permute.xlu0 %376
  %380 = vset.pattern.permute.xlu0 0
  %381 = vperm.xlu0 %380, %v59
  %v382 = vpop.permute.xlu0 %381
  %385 = vset.pattern.permute.xlu0 0
  %386 = vperm.xlu0 %385, %v60
  %v387 = vpop.permute.xlu0 %386
  %390 = vset.pattern.permute.xlu0 0
  %391 = vperm.xlu0 %390, %v61
  %v392 = vpop.permute.xlu0 %391
  %395 = vset.pattern.permute.xlu0 0
  %396 = vperm.xlu0 %395, %v62
  %v397 = vpop.permute.xlu0 %396
  %400 = vset.pattern.permute.xlu0 0
  %401 = vperm.xlu0 %400, %v63
  %v402 = vpop.permute.xlu0 %401
  %405 = vset.pattern.permute.xlu0 0
  %406 = vperm.xlu0 %405, %v64
  %v407 = vpop.permute.xlu0 %406
  %410 = vset.pattern.permute.xlu0 0
  %411 = vperm.xlu0 %410, %v65
  %v412 = vpop.permute.xlu0 %411
  %415 = vset.pattern.permute.xlu0 0
  %416 = vperm.xlu0 %415, %v66
  %v417 = vpop.permute.xlu0 %416
  %420 = vset.pattern.permute.xlu0 0
  %421 = vperm.xlu0 %420, %v67
  %v422 = vpop.permute.xlu0 %421
  %425 = vset.pattern.permute.xlu0 0
  %426 = vperm.xlu0 %425, %v68
  %v427 = vpop.permute.xlu0 %426
  %430 = vset.pattern.permute.xlu0 0
  %431 = vperm.xlu0 %430, %v69
  %v432 = vpop.permute.xlu0 %431
  %435 = vset.pattern.permute.xlu0 0
  %436 = vperm.xlu0 %435, %v70
  %v437 = vpop.permute.xlu0 %436
  %440 = vset.pattern.permute.xlu0 0
  %441 = vperm.xlu0 %440, %v71
  %v442 = vpop.permute.xlu0 %441
  %445 = vset.pattern.permute.xlu0 0
  %446 = vperm.xlu0 %445, %v72
  %v447 = vpop.permute.xlu0 %446
  %450 = vset.pattern.permute.xlu0 0
  %451 = vperm.xlu0 %450, %v73
  %v452 = vpop.permute.xlu0 %451
  %455 = vset.pattern.permute.xlu0 0
  %456 = vperm.xlu0 %455, %v74
  %v457 = vpop.permute.xlu0 %456
  %460 = vset.pattern.permute.xlu0 0
  %461 = vperm.xlu0 %460, %v75
  %v462 = vpop.permute.xlu0 %461
  %465 = vset.pattern.permute.xlu0 0
  %466 = vperm.xlu0 %465, %v76
  %v467 = vpop.permute.xlu0 %466
  %470 = vset.pattern.permute.xlu0 0
  %471 = vperm.xlu0 %470, %v77
  %v472 = vpop.permute.xlu0 %471
  %475 = vset.pattern.permute.xlu0 0
  %476 = vperm.xlu0 %475, %v78
  %v477 = vpop.permute.xlu0 %476
  %480 = vset.pattern.permute.xlu0 0
  %481 = vperm.xlu0 %480, %v79
  %v482 = vpop.permute.xlu0 %481
  %485 = vset.pattern.permute.xlu0 0
  %486 = vperm.xlu0 %485, %v80
  %v487 = vpop.permute.xlu0 %486
  %490 = vset.pattern.permute.xlu0 0
  %491 = vperm.xlu0 %490, %v81
  %v492 = vpop.permute.xlu0 %491
  %495 = vset.pattern.permute.xlu0 0
  %496 = vperm.xlu0 %495, %v82
  %v497 = vpop.permute.xlu0 %496
  %500 = vset.pattern.permute.xlu0 0
  %501 = vperm.xlu0 %500, %v83
  %v502 = vpop.permute.xlu0 %501
  %505 = vset.pattern.permute.xlu0 0
  %506 = vperm.xlu0 %505, %v84
  %v507 = vpop.permute.xlu0 %506
  %510 = vset.pattern.permute.xlu0 0
  %511 = vperm.xlu0 %510, %v85
  %v512 = vpop.permute.xlu0 %511
  %515 = vset.pattern.permute.xlu0 0
  %516 = vperm.xlu0 %515, %v86
  %v517 = vpop.permute.xlu0 %516
  %520 = vset.pattern.permute.xlu0 0
  %521 = vperm.xlu0 %520, %v87
  %v522 = vpop.permute.xlu0 %521
  %525 = vset.pattern.permute.xlu0 0
  %526 = vperm.xlu0 %525, %v88
  %v527 = vpop.permute.xlu0 %526
  %530 = vset.pattern.permute.xlu0 0
  %531 = vperm.xlu0 %530, %v89
  %v532 = vpop.permute.xlu0 %531
  %535 = vset.pattern.permute.xlu0 0
  %536 = vperm.xlu0 %535, %v90
  %v537 = vpop.permute.xlu0 %536
  %540 = vset.pattern.permute.xlu0 0
  %541 = vperm.xlu0 %540, %v91
  %v542 = vpop.permute.xlu0 %541
  %545 = vset.pattern.permute.xlu0 0
  %546 = vperm.xlu0 %545, %v92
  %v547 = vpop.permute.xlu0 %546
  %550 = vset.pattern.permute.xlu0 0
  %551 = vperm.xlu0 %550, %v93
  %v552 = vpop.permute.xlu0 %551
  %555 = vset.pattern.permute.xlu0 0
  %556 = vperm.xlu0 %555, %v94
  %v557 = vpop.permute.xlu0 %556
  %560 = vset.pattern.permute.xlu0 0
  %561 = vperm.xlu0 %560, %v95
  %v562 = vpop.permute.xlu0 %561
  %565 = vset.pattern.permute.xlu0 0
  %566 = vperm.xlu0 %565, %v96
  %v567 = vpop.permute.xlu0 %566
  %570 = vset.pattern.permute.xlu0 0
  %571 = vperm.xlu0 %570, %v97
  %v572 = vpop.permute.xlu0 %571
  %575 = vset.pattern.permute.xlu0 0
  %576 = vperm.xlu0 %575, %v98
  %v577 = vpop.permute.xlu0 %576
  %580 = vset.pattern.permute.xlu0 0
  %581 = vperm.xlu0 %580, %v99
  %v582 = vpop.permute.xlu0 %581
  %585 = vset.pattern.permute.xlu0 0
  %586 = vperm.xlu0 %585, %v100
  %v587 = vpop.permute.xlu0 %586
  %590 = vset.pattern.permute.xlu0 0
  %591 = vperm.xlu0 %590, %v101
  %v592 = vpop.permute.xlu0 %591
  %595 = vset.pattern.permute.xlu0 0
  %596 = vperm.xlu0 %595, %v102
  %v597 = vpop.permute.xlu0 %596
  %600 = vset.pattern.permute.xlu0 0
  %601 = vperm.xlu0 %600, %v103
  %v602 = vpop.permute.xlu0 %601
  %605 = vset.pattern.permute.xlu0 0
  %606 = vperm.xlu0 %605, %v104
  %v607 = vpop.permute.xlu0 %606
  %610 = vset.pattern.permute.xlu0 0
  %611 = vperm.xlu0 %610, %v105
  %v612 = vpop.permute.xlu0 %611
  %615 = vset.pattern.permute.xlu0 0
  %616 = vperm.xlu0 %615, %v106
  %v617 = vpop.permute.xlu0 %616
  %620 = vset.pattern.permute.xlu0 0
  %621 = vperm.xlu0 %620, %v107
  %v622 = vpop.permute.xlu0 %621
  %625 = vset.pattern.permute.xlu0 0
  %626 = vperm.xlu0 %625, %v108
  %v627 = vpop.permute.xlu0 %626
  %630 = vset.pattern.permute.xlu0 0
  %631 = vperm.xlu0 %630, %v109
  %v632 = vpop.permute.xlu0 %631
  %635 = vset.pattern.permute.xlu0 0
  %636 = vperm.xlu0 %635, %v110
  %v637 = vpop.permute.xlu0 %636
  %640 = vset.pattern.permute.xlu0 0
  %641 = vperm.xlu0 %640, %v111
  %v642 = vpop.permute.xlu0 %641
  %645 = vset.pattern.permute.xlu0 0
  %646 = vperm.xlu0 %645, %v112
  %v647 = vpop.permute.xlu0 %646
  %650 = vset.pattern.permute.xlu0 0
  %651 = vperm.xlu0 %650, %v113
  %v652 = vpop.permute.xlu0 %651
  %655 = vset.pattern.permute.xlu0 0
  %656 = vperm.xlu0 %655, %v114
  %v657 = vpop.permute.xlu0 %656
  %660 = vset.pattern.permute.xlu0 0
  %661 = vperm.xlu0 %660, %v115
  %v662 = vpop.permute.xlu0 %661
  %665 = vset.pattern.permute.xlu0 0
  %666 = vperm.xlu0 %665, %v116
  %v667 = vpop.permute.xlu0 %666
  %670 = vset.pattern.permute.xlu0 0
  %671 = vperm.xlu0 %670, %v117
  %v672 = vpop.permute.xlu0 %671
  %675 = vset.pattern.permute.xlu0 0
  %676 = vperm.xlu0 %675, %v118
  %v677 = vpop.permute.xlu0 %676
  %680 = vset.pattern.permute.xlu0 0
  %681 = vperm.xlu0 %680, %v119
  %v682 = vpop.permute.xlu0 %681
  %685 = vset.pattern.permute.xlu0 0
  %686 = vperm.xlu0 %685, %v120
  %v687 = vpop.permute.xlu0 %686
  %690 = vset.pattern.permute.xlu0 0
  %691 = vperm.xlu0 %690, %v121
  %v692 = vpop.permute.xlu0 %691
  %695 = vset.pattern.permute.xlu0 0
  %696 = vperm.xlu0 %695, %v122
  %v697 = vpop.permute.xlu0 %696
  %700 = vset.pattern.permute.xlu0 0
  %701 = vperm.xlu0 %700, %v123
  %v702 = vpop.permute.xlu0 %701
  %705 = vset.pattern.permute.xlu0 0
  %706 = vperm.xlu0 %705, %v124
  %v707 = vpop.permute.xlu0 %706
  %710 = vset.pattern.permute.xlu0 0
  %711 = vperm.xlu0 %710, %v125
  %v712 = vpop.permute.xlu0 %711
  %715 = vset.pattern.permute.xlu0 0
  %716 = vperm.xlu0 %715, %v126
  %v717 = vpop.permute.xlu0 %716
  %720 = vset.pattern.permute.xlu0 0
  %721 = vperm.xlu0 %720, %v127
  %v722 = vpop.permute.xlu0 %721
  %725 = vset.pattern.permute.xlu0 0
  %726 = vperm.xlu0 %725, %v128
  %v727 = vpop.permute.xlu0 %726
  %730 = vset.pattern.permute.xlu0 0
  %731 = vperm.xlu0 %730, %v129
  %v732 = vpop.permute.xlu0 %731
  %735 = vset.pattern.permute.xlu0 0
  %736 = vperm.xlu0 %735, %v130
  %v737 = vpop.permute.xlu0 %736
  %740 = vset.pattern.permute.xlu0 0
  %741 = vperm.xlu0 %740, %v131
  %v742 = vpop.permute.xlu0 %741
  %745 = vset.pattern.permute.xlu0 0
  %746 = vperm.xlu0 %745, %v132
  %v747 = vpop.permute.xlu0 %746
  %750 = vset.pattern.permute.xlu0 0
  %751 = vperm.xlu0 %750, %v133
  %v752 = vpop.permute.xlu0 %751
  %755 = vset.pattern.permute.xlu0 0
  %756 = vperm.xlu0 %755, %v134
  %v757 = vpop.permute.xlu0 %756
  %760 = vset.pattern.permute.xlu0 0
  %761 = vperm.xlu0 %760, %v135
  %v762 = vpop.permute.xlu0 %761
  %765 = vset.pattern.permute.xlu0 0
  %766 = vperm.xlu0 %765, %v136
  %v767 = vpop.permute.xlu0 %766
  %770 = vset.pattern.permute.xlu0 0
  %771 = vperm.xlu0 %770, %v137
  %v772 = vpop.permute.xlu0 %771
  %775 = vset.pattern.permute.xlu0 0
  %776 = vperm.xlu0 %775, %v138
  %v777 = vpop.permute.xlu0 %776
  %v779 = vlaneseq
  %v780 = vand.u32 %v779, 127
  %vm781 = vcmp.ge.s32.totalorder %v780, 64
  %782 = vset.pattern.permute.xlu0 1
  %783 = vperm.xlu0 %782, %v11
  %v784 = vpop.permute.xlu0 %783
  %786 = vset.pattern.permute.xlu0 1
  %787 = vperm.xlu0 %786, %v12
  %v788 = vpop.permute.xlu0 %787
  %790 = vset.pattern.permute.xlu0 1
  %791 = vperm.xlu0 %790, %v13
  %v792 = vpop.permute.xlu0 %791
  %794 = vset.pattern.permute.xlu0 1
  %795 = vperm.xlu0 %794, %v14
  %v796 = vpop.permute.xlu0 %795
  %798 = vset.pattern.permute.xlu0 1
  %799 = vperm.xlu0 %798, %v15
  %v800 = vpop.permute.xlu0 %799
  %802 = vset.pattern.permute.xlu0 1
  %803 = vperm.xlu0 %802, %v16
  %v804 = vpop.permute.xlu0 %803
  %806 = vset.pattern.permute.xlu0 1
  %807 = vperm.xlu0 %806, %v17
  %v808 = vpop.permute.xlu0 %807
  %810 = vset.pattern.permute.xlu0 1
  %811 = vperm.xlu0 %810, %v18
  %v812 = vpop.permute.xlu0 %811
  %814 = vset.pattern.permute.xlu0 1
  %815 = vperm.xlu0 %814, %v19
  %v816 = vpop.permute.xlu0 %815
  %818 = vset.pattern.permute.xlu0 1
  %819 = vperm.xlu0 %818, %v20
  %v820 = vpop.permute.xlu0 %819
  %822 = vset.pattern.permute.xlu0 1
  %823 = vperm.xlu0 %822, %v21
  %v824 = vpop.permute.xlu0 %823
  %826 = vset.pattern.permute.xlu0 1
  %827 = vperm.xlu0 %826, %v22
  %v828 = vpop.permute.xlu0 %827
  %830 = vset.pattern.permute.xlu0 1
  %831 = vperm.xlu0 %830, %v23
  %v832 = vpop.permute.xlu0 %831
  %834 = vset.pattern.permute.xlu0 1
  %835 = vperm.xlu0 %834, %v24
  %v836 = vpop.permute.xlu0 %835
  %838 = vset.pattern.permute.xlu0 1
  %839 = vperm.xlu0 %838, %v25
  %v840 = vpop.permute.xlu0 %839
  %842 = vset.pattern.permute.xlu0 1
  %843 = vperm.xlu0 %842, %v26
  %v844 = vpop.permute.xlu0 %843
  %846 = vset.pattern.permute.xlu0 1
  %847 = vperm.xlu0 %846, %v27
  %v848 = vpop.permute.xlu0 %847
  %850 = vset.pattern.permute.xlu0 1
  %851 = vperm.xlu0 %850, %v28
  %v852 = vpop.permute.xlu0 %851
  %854 = vset.pattern.permute.xlu0 1
  %855 = vperm.xlu0 %854, %v29
  %v856 = vpop.permute.xlu0 %855
  %858 = vset.pattern.permute.xlu0 1
  %859 = vperm.xlu0 %858, %v30
  %v860 = vpop.permute.xlu0 %859
  %862 = vset.pattern.permute.xlu0 1
  %863 = vperm.xlu0 %862, %v31
  %v864 = vpop.permute.xlu0 %863
  %866 = vset.pattern.permute.xlu0 1
  %867 = vperm.xlu0 %866, %v32
  %v868 = vpop.permute.xlu0 %867
  %870 = vset.pattern.permute.xlu0 1
  %871 = vperm.xlu0 %870, %v33
  %v872 = vpop.permute.xlu0 %871
  %874 = vset.pattern.permute.xlu0 1
  %875 = vperm.xlu0 %874, %v34
  %v876 = vpop.permute.xlu0 %875
  %878 = vset.pattern.permute.xlu0 1
  %879 = vperm.xlu0 %878, %v35
  %v880 = vpop.permute.xlu0 %879
  %882 = vset.pattern.permute.xlu0 1
  %883 = vperm.xlu0 %882, %v36
  %v884 = vpop.permute.xlu0 %883
  %886 = vset.pattern.permute.xlu0 1
  %887 = vperm.xlu0 %886, %v37
  %v888 = vpop.permute.xlu0 %887
  %890 = vset.pattern.permute.xlu0 1
  %891 = vperm.xlu0 %890, %v38
  %v892 = vpop.permute.xlu0 %891
  %894 = vset.pattern.permute.xlu0 1
  %895 = vperm.xlu0 %894, %v39
  %v896 = vpop.permute.xlu0 %895
  %898 = vset.pattern.permute.xlu0 1
  %899 = vperm.xlu0 %898, %v40
  %v900 = vpop.permute.xlu0 %899
  %902 = vset.pattern.permute.xlu0 1
  %903 = vperm.xlu0 %902, %v41
  %v904 = vpop.permute.xlu0 %903
  %906 = vset.pattern.permute.xlu0 1
  %907 = vperm.xlu0 %906, %v42
  %v908 = vpop.permute.xlu0 %907
  %910 = vset.pattern.permute.xlu0 1
  %911 = vperm.xlu0 %910, %v43
  %v912 = vpop.permute.xlu0 %911
  %914 = vset.pattern.permute.xlu0 1
  %915 = vperm.xlu0 %914, %v44
  %v916 = vpop.permute.xlu0 %915
  %918 = vset.pattern.permute.xlu0 1
  %919 = vperm.xlu0 %918, %v45
  %v920 = vpop.permute.xlu0 %919
  %922 = vset.pattern.permute.xlu0 1
  %923 = vperm.xlu0 %922, %v46
  %v924 = vpop.permute.xlu0 %923
  %926 = vset.pattern.permute.xlu0 1
  %927 = vperm.xlu0 %926, %v47
  %v928 = vpop.permute.xlu0 %927
  %930 = vset.pattern.permute.xlu0 1
  %931 = vperm.xlu0 %930, %v48
  %v932 = vpop.permute.xlu0 %931
  %934 = vset.pattern.permute.xlu0 1
  %935 = vperm.xlu0 %934, %v49
  %v936 = vpop.permute.xlu0 %935
  %938 = vset.pattern.permute.xlu0 1
  %939 = vperm.xlu0 %938, %v50
  %v940 = vpop.permute.xlu0 %939
  %942 = vset.pattern.permute.xlu0 1
  %943 = vperm.xlu0 %942, %v51
  %v944 = vpop.permute.xlu0 %943
  %946 = vset.pattern.permute.xlu0 1
  %947 = vperm.xlu0 %946, %v52
  %v948 = vpop.permute.xlu0 %947
  %950 = vset.pattern.permute.xlu0 1
  %951 = vperm.xlu0 %950, %v53
  %v952 = vpop.permute.xlu0 %951
  %954 = vset.pattern.permute.xlu0 1
  %955 = vperm.xlu0 %954, %v54
  %v956 = vpop.permute.xlu0 %955
  %958 = vset.pattern.permute.xlu0 1
  %959 = vperm.xlu0 %958, %v55
  %v960 = vpop.permute.xlu0 %959
  %962 = vset.pattern.permute.xlu0 1
  %963 = vperm.xlu0 %962, %v56
  %v964 = vpop.permute.xlu0 %963
  %966 = vset.pattern.permute.xlu0 1
  %967 = vperm.xlu0 %966, %v57
  %v968 = vpop.permute.xlu0 %967
  %970 = vset.pattern.permute.xlu0 1
  %971 = vperm.xlu0 %970, %v58
  %v972 = vpop.permute.xlu0 %971
  %974 = vset.pattern.permute.xlu0 1
  %975 = vperm.xlu0 %974, %v59
  %v976 = vpop.permute.xlu0 %975
  %978 = vset.pattern.permute.xlu0 1
  %979 = vperm.xlu0 %978, %v60
  %v980 = vpop.permute.xlu0 %979
  %982 = vset.pattern.permute.xlu0 1
  %983 = vperm.xlu0 %982, %v61
  %v984 = vpop.permute.xlu0 %983
  %986 = vset.pattern.permute.xlu0 1
  %987 = vperm.xlu0 %986, %v62
  %v988 = vpop.permute.xlu0 %987
  %990 = vset.pattern.permute.xlu0 1
  %991 = vperm.xlu0 %990, %v63
  %v992 = vpop.permute.xlu0 %991
  %994 = vset.pattern.permute.xlu0 1
  %995 = vperm.xlu0 %994, %v64
  %v996 = vpop.permute.xlu0 %995
  %998 = vset.pattern.permute.xlu0 1
  %999 = vperm.xlu0 %998, %v65
  %v1000 = vpop.permute.xlu0 %999
  %1002 = vset.pattern.permute.xlu0 1
  %1003 = vperm.xlu0 %1002, %v66
  %v1004 = vpop.permute.xlu0 %1003
  %1006 = vset.pattern.permute.xlu0 1
  %1007 = vperm.xlu0 %1006, %v67
  %v1008 = vpop.permute.xlu0 %1007
  %1010 = vset.pattern.permute.xlu0 1
  %1011 = vperm.xlu0 %1010, %v68
  %v1012 = vpop.permute.xlu0 %1011
  %1014 = vset.pattern.permute.xlu0 1
  %1015 = vperm.xlu0 %1014, %v69
  %v1016 = vpop.permute.xlu0 %1015
  %1018 = vset.pattern.permute.xlu0 1
  %1019 = vperm.xlu0 %1018, %v70
  %v1020 = vpop.permute.xlu0 %1019
  %1022 = vset.pattern.permute.xlu0 1
  %1023 = vperm.xlu0 %1022, %v71
  %v1024 = vpop.permute.xlu0 %1023
  %1026 = vset.pattern.permute.xlu0 1
  %1027 = vperm.xlu0 %1026, %v72
  %v1028 = vpop.permute.xlu0 %1027
  %1030 = vset.pattern.permute.xlu0 1
  %1031 = vperm.xlu0 %1030, %v73
  %v1032 = vpop.permute.xlu0 %1031
  %1034 = vset.pattern.permute.xlu0 1
  %1035 = vperm.xlu0 %1034, %v74
  %v1036 = vpop.permute.xlu0 %1035
  %1038 = vset.pattern.permute.xlu0 1
  %1039 = vperm.xlu0 %1038, %v75
  %v1040 = vpop.permute.xlu0 %1039
  %1042 = vset.pattern.permute.xlu0 1
  %1043 = vperm.xlu0 %1042, %v76
  %v1044 = vpop.permute.xlu0 %1043
  %1046 = vset.pattern.permute.xlu0 1
  %1047 = vperm.xlu0 %1046, %v77
  %v1048 = vpop.permute.xlu0 %1047
  %1050 = vset.pattern.permute.xlu0 1
  %1051 = vperm.xlu0 %1050, %v78
  %v1052 = vpop.permute.xlu0 %1051
  %1054 = vset.pattern.permute.xlu0 1
  %1055 = vperm.xlu0 %1054, %v79
  %v1056 = vpop.permute.xlu0 %1055
  %1058 = vset.pattern.permute.xlu0 1
  %1059 = vperm.xlu0 %1058, %v80
  %v1060 = vpop.permute.xlu0 %1059
  %1062 = vset.pattern.permute.xlu0 1
  %1063 = vperm.xlu0 %1062, %v81
  %v1064 = vpop.permute.xlu0 %1063
  %1066 = vset.pattern.permute.xlu0 1
  %1067 = vperm.xlu0 %1066, %v82
  %v1068 = vpop.permute.xlu0 %1067
  %1070 = vset.pattern.permute.xlu0 1
  %1071 = vperm.xlu0 %1070, %v83
  %v1072 = vpop.permute.xlu0 %1071
  %1074 = vset.pattern.permute.xlu0 1
  %1075 = vperm.xlu0 %1074, %v84
  %v1076 = vpop.permute.xlu0 %1075
  %1078 = vset.pattern.permute.xlu0 1
  %1079 = vperm.xlu0 %1078, %v85
  %v1080 = vpop.permute.xlu0 %1079
  %1082 = vset.pattern.permute.xlu0 1
  %1083 = vperm.xlu0 %1082, %v86
  %v1084 = vpop.permute.xlu0 %1083
  %1086 = vset.pattern.permute.xlu0 1
  %1087 = vperm.xlu0 %1086, %v87
  %v1088 = vpop.permute.xlu0 %1087
  %1090 = vset.pattern.permute.xlu0 1
  %1091 = vperm.xlu0 %1090, %v88
  %v1092 = vpop.permute.xlu0 %1091
  %1094 = vset.pattern.permute.xlu0 1
  %1095 = vperm.xlu0 %1094, %v89
  %v1096 = vpop.permute.xlu0 %1095
  %1098 = vset.pattern.permute.xlu0 1
  %1099 = vperm.xlu0 %1098, %v90
  %v1100 = vpop.permute.xlu0 %1099
  %1102 = vset.pattern.permute.xlu0 1
  %1103 = vperm.xlu0 %1102, %v91
  %v1104 = vpop.permute.xlu0 %1103
  %1106 = vset.pattern.permute.xlu0 1
  %1107 = vperm.xlu0 %1106, %v92
  %v1108 = vpop.permute.xlu0 %1107
  %1110 = vset.pattern.permute.xlu0 1
  %1111 = vperm.xlu0 %1110, %v93
  %v1112 = vpop.permute.xlu0 %1111
  %1114 = vset.pattern.permute.xlu0 1
  %1115 = vperm.xlu0 %1114, %v94
  %v1116 = vpop.permute.xlu0 %1115
  %1118 = vset.pattern.permute.xlu0 1
  %1119 = vperm.xlu0 %1118, %v95
  %v1120 = vpop.permute.xlu0 %1119
  %1122 = vset.pattern.permute.xlu0 1
  %1123 = vperm.xlu0 %1122, %v96
  %v1124 = vpop.permute.xlu0 %1123
  %1126 = vset.pattern.permute.xlu0 1
  %1127 = vperm.xlu0 %1126, %v97
  %v1128 = vpop.permute.xlu0 %1127
  %1130 = vset.pattern.permute.xlu0 1
  %1131 = vperm.xlu0 %1130, %v98
  %v1132 = vpop.permute.xlu0 %1131
  %1134 = vset.pattern.permute.xlu0 1
  %1135 = vperm.xlu0 %1134, %v99
  %v1136 = vpop.permute.xlu0 %1135
  %1138 = vset.pattern.permute.xlu0 1
  %1139 = vperm.xlu0 %1138, %v100
  %v1140 = vpop.permute.xlu0 %1139
  %1142 = vset.pattern.permute.xlu0 1
  %1143 = vperm.xlu0 %1142, %v101
  %v1144 = vpop.permute.xlu0 %1143
  %1146 = vset.pattern.permute.xlu0 1
  %1147 = vperm.xlu0 %1146, %v102
  %v1148 = vpop.permute.xlu0 %1147
  %1150 = vset.pattern.permute.xlu0 1
  %1151 = vperm.xlu0 %1150, %v103
  %v1152 = vpop.permute.xlu0 %1151
  %1154 = vset.pattern.permute.xlu0 1
  %1155 = vperm.xlu0 %1154, %v104
  %v1156 = vpop.permute.xlu0 %1155
  %1158 = vset.pattern.permute.xlu0 1
  %1159 = vperm.xlu0 %1158, %v105
  %v1160 = vpop.permute.xlu0 %1159
  %1162 = vset.pattern.permute.xlu0 1
  %1163 = vperm.xlu0 %1162, %v106
  %v1164 = vpop.permute.xlu0 %1163
  %1166 = vset.pattern.permute.xlu0 1
  %1167 = vperm.xlu0 %1166, %v107
  %v1168 = vpop.permute.xlu0 %1167
  %1170 = vset.pattern.permute.xlu0 1
  %1171 = vperm.xlu0 %1170, %v108
  %v1172 = vpop.permute.xlu0 %1171
  %1174 = vset.pattern.permute.xlu0 1
  %1175 = vperm.xlu0 %1174, %v109
  %v1176 = vpop.permute.xlu0 %1175
  %1178 = vset.pattern.permute.xlu0 1
  %1179 = vperm.xlu0 %1178, %v110
  %v1180 = vpop.permute.xlu0 %1179
  %1182 = vset.pattern.permute.xlu0 1
  %1183 = vperm.xlu0 %1182, %v111
  %v1184 = vpop.permute.xlu0 %1183
  %1186 = vset.pattern.permute.xlu0 1
  %1187 = vperm.xlu0 %1186, %v112
  %v1188 = vpop.permute.xlu0 %1187
  %1190 = vset.pattern.permute.xlu0 1
  %1191 = vperm.xlu0 %1190, %v113
  %v1192 = vpop.permute.xlu0 %1191
  %1194 = vset.pattern.permute.xlu0 1
  %1195 = vperm.xlu0 %1194, %v114
  %v1196 = vpop.permute.xlu0 %1195
  %1198 = vset.pattern.permute.xlu0 1
  %1199 = vperm.xlu0 %1198, %v115
  %v1200 = vpop.permute.xlu0 %1199
  %1202 = vset.pattern.permute.xlu0 1
  %1203 = vperm.xlu0 %1202, %v116
  %v1204 = vpop.permute.xlu0 %1203
  %1206 = vset.pattern.permute.xlu0 1
  %1207 = vperm.xlu0 %1206, %v117
  %v1208 = vpop.permute.xlu0 %1207
  %1210 = vset.pattern.permute.xlu0 1
  %1211 = vperm.xlu0 %1210, %v118
  %v1212 = vpop.permute.xlu0 %1211
  %1214 = vset.pattern.permute.xlu0 1
  %1215 = vperm.xlu0 %1214, %v119
  %v1216 = vpop.permute.xlu0 %1215
  %1218 = vset.pattern.permute.xlu0 1
  %1219 = vperm.xlu0 %1218, %v120
  %v1220 = vpop.permute.xlu0 %1219
  %1222 = vset.pattern.permute.xlu0 1
  %1223 = vperm.xlu0 %1222, %v121
  %v1224 = vpop.permute.xlu0 %1223
  %1226 = vset.pattern.permute.xlu0 1
  %1227 = vperm.xlu0 %1226, %v122
  %v1228 = vpop.permute.xlu0 %1227
  %1230 = vset.pattern.permute.xlu0 1
  %1231 = vperm.xlu0 %1230, %v123
  %v1232 = vpop.permute.xlu0 %1231
  %1234 = vset.pattern.permute.xlu0 1
  %1235 = vperm.xlu0 %1234, %v124
  %v1236 = vpop.permute.xlu0 %1235
  %1238 = vset.pattern.permute.xlu0 1
  %1239 = vperm.xlu0 %1238, %v125
  %v1240 = vpop.permute.xlu0 %1239
  %1242 = vset.pattern.permute.xlu0 1
  %1243 = vperm.xlu0 %1242, %v126
  %v1244 = vpop.permute.xlu0 %1243
  %1246 = vset.pattern.permute.xlu0 1
  %1247 = vperm.xlu0 %1246, %v127
  %v1248 = vpop.permute.xlu0 %1247
  %1250 = vset.pattern.permute.xlu0 1
  %1251 = vperm.xlu0 %1250, %v128
  %v1252 = vpop.permute.xlu0 %1251
  %1254 = vset.pattern.permute.xlu0 1
  %1255 = vperm.xlu0 %1254, %v129
  %v1256 = vpop.permute.xlu0 %1255
  %1258 = vset.pattern.permute.xlu0 1
  %1259 = vperm.xlu0 %1258, %v130
  %v1260 = vpop.permute.xlu0 %1259
  %1262 = vset.pattern.permute.xlu0 1
  %1263 = vperm.xlu0 %1262, %v131
  %v1264 = vpop.permute.xlu0 %1263
  %1266 = vset.pattern.permute.xlu0 1
  %1267 = vperm.xlu0 %1266, %v132
  %v1268 = vpop.permute.xlu0 %1267
  %1270 = vset.pattern.permute.xlu0 1
  %1271 = vperm.xlu0 %1270, %v133
  %v1272 = vpop.permute.xlu0 %1271
  %1274 = vset.pattern.permute.xlu0 1
  %1275 = vperm.xlu0 %1274, %v134
  %v1276 = vpop.permute.xlu0 %1275
  %1278 = vset.pattern.permute.xlu0 1
  %1279 = vperm.xlu0 %1278, %v135
  %v1280 = vpop.permute.xlu0 %1279
  %1282 = vset.pattern.permute.xlu0 1
  %1283 = vperm.xlu0 %1282, %v136
  %v1284 = vpop.permute.xlu0 %1283
  %1286 = vset.pattern.permute.xlu0 1
  %1287 = vperm.xlu0 %1286, %v137
  %v1288 = vpop.permute.xlu0 %1287
  %1290 = vset.pattern.permute.xlu0 1
  %1291 = vperm.xlu0 %1290, %v138
  %v1292 = vpop.permute.xlu0 %1291
  %v1294 = vsel %vm781, %v784, %v142
  %v1295 = vsel %vm781, %v788, %v147
  %v1296 = vsel %vm781, %v792, %v152
  %v1297 = vsel %vm781, %v796, %v157
  %v1298 = vsel %vm781, %v800, %v162
  %v1299 = vsel %vm781, %v804, %v167
  %v1300 = vsel %vm781, %v808, %v172
  %v1301 = vsel %vm781, %v812, %v177
  %v1302 = vsel %vm781, %v816, %v182
  %v1303 = vsel %vm781, %v820, %v187
  %v1304 = vsel %vm781, %v824, %v192
  %v1305 = vsel %vm781, %v828, %v197
  %v1306 = vsel %vm781, %v832, %v202
  %v1307 = vsel %vm781, %v836, %v207
  %v1308 = vsel %vm781, %v840, %v212
  %v1309 = vsel %vm781, %v844, %v217
  %v1310 = vsel %vm781, %v848, %v222
  %v1311 = vsel %vm781, %v852, %v227
  %v1312 = vsel %vm781, %v856, %v232
  %v1313 = vsel %vm781, %v860, %v237
  %v1314 = vsel %vm781, %v864, %v242
  %v1315 = vsel %vm781, %v868, %v247
  %v1316 = vsel %vm781, %v872, %v252
  %v1317 = vsel %vm781, %v876, %v257
  %v1318 = vsel %vm781, %v880, %v262
  %v1319 = vsel %vm781, %v884, %v267
  %v1320 = vsel %vm781, %v888, %v272
  %v1321 = vsel %vm781, %v892, %v277
  %v1322 = vsel %vm781, %v896, %v282
  %v1323 = vsel %vm781, %v900, %v287
  %v1324 = vsel %vm781, %v904, %v292
  %v1325 = vsel %vm781, %v908, %v297
  %v1326 = vsel %vm781, %v912, %v302
  %v1327 = vsel %vm781, %v916, %v307
  %v1328 = vsel %vm781, %v920, %v312
  %v1329 = vsel %vm781, %v924, %v317
  %v1330 = vsel %vm781, %v928, %v322
  %v1331 = vsel %vm781, %v932, %v327
  %v1332 = vsel %vm781, %v936, %v332
  %v1333 = vsel %vm781, %v940, %v337
  %v1334 = vsel %vm781, %v944, %v342
  %v1335 = vsel %vm781, %v948, %v347
  %v1336 = vsel %vm781, %v952, %v352
  %v1337 = vsel %vm781, %v956, %v357
  %v1338 = vsel %vm781, %v960, %v362
  %v1339 = vsel %vm781, %v964, %v367
  %v1340 = vsel %vm781, %v968, %v372
  %v1341 = vsel %vm781, %v972, %v377
  %v1342 = vsel %vm781, %v976, %v382
  %v1343 = vsel %vm781, %v980, %v387
  %v1344 = vsel %vm781, %v984, %v392
  %v1345 = vsel %vm781, %v988, %v397
  %v1346 = vsel %vm781, %v992, %v402
  %v1347 = vsel %vm781, %v996, %v407
  %v1348 = vsel %vm781, %v1000, %v412
  %v1349 = vsel %vm781, %v1004, %v417
  %v1350 = vsel %vm781, %v1008, %v422
  %v1351 = vsel %vm781, %v1012, %v427
  %v1352 = vsel %vm781, %v1016, %v432
  %v1353 = vsel %vm781, %v1020, %v437
  %v1354 = vsel %vm781, %v1024, %v442
  %v1355 = vsel %vm781, %v1028, %v447
  %v1356 = vsel %vm781, %v1032, %v452
  %v1357 = vsel %vm781, %v1036, %v457
  %v1358 = vsel %vm781, %v1040, %v462
  %v1359 = vsel %vm781, %v1044, %v467
  %v1360 = vsel %vm781, %v1048, %v472
  %v1361 = vsel %vm781, %v1052, %v477
  %v1362 = vsel %vm781, %v1056, %v482
  %v1363 = vsel %vm781, %v1060, %v487
  %v1364 = vsel %vm781, %v1064, %v492
  %v1365 = vsel %vm781, %v1068, %v497
  %v1366 = vsel %vm781, %v1072, %v502
  %v1367 = vsel %vm781, %v1076, %v507
  %v1368 = vsel %vm781, %v1080, %v512
  %v1369 = vsel %vm781, %v1084, %v517
  %v1370 = vsel %vm781, %v1088, %v522
  %v1371 = vsel %vm781, %v1092, %v527
  %v1372 = vsel %vm781, %v1096, %v532
  %v1373 = vsel %vm781, %v1100, %v537
  %v1374 = vsel %vm781, %v1104, %v542
  %v1375 = vsel %vm781, %v1108, %v547
  %v1376 = vsel %vm781, %v1112, %v552
  %v1377 = vsel %vm781, %v1116, %v557
  %v1378 = vsel %vm781, %v1120, %v562
  %v1379 = vsel %vm781, %v1124, %v567
  %v1380 = vsel %vm781, %v1128, %v572
  %v1381 = vsel %vm781, %v1132, %v577
  %v1382 = vsel %vm781, %v1136, %v582
  %v1383 = vsel %vm781, %v1140, %v587
  %v1384 = vsel %vm781, %v1144, %v592
  %v1385 = vsel %vm781, %v1148, %v597
  %v1386 = vsel %vm781, %v1152, %v602
  %v1387 = vsel %vm781, %v1156, %v607
  %v1388 = vsel %vm781, %v1160, %v612
  %v1389 = vsel %vm781, %v1164, %v617
  %v1390 = vsel %vm781, %v1168, %v622
  %v1391 = vsel %vm781, %v1172, %v627
  %v1392 = vsel %vm781, %v1176, %v632
  %v1393 = vsel %vm781, %v1180, %v637
  %v1394 = vsel %vm781, %v1184, %v642
  %v1395 = vsel %vm781, %v1188, %v647
  %v1396 = vsel %vm781, %v1192, %v652
  %v1397 = vsel %vm781, %v1196, %v657
  %v1398 = vsel %vm781, %v1200, %v662
  %v1399 = vsel %vm781, %v1204, %v667
  %v1400 = vsel %vm781, %v1208, %v672
  %v1401 = vsel %vm781, %v1212, %v677
  %v1402 = vsel %vm781, %v1216, %v682
  %v1403 = vsel %vm781, %v1220, %v687
  %v1404 = vsel %vm781, %v1224, %v692
  %v1405 = vsel %vm781, %v1228, %v697
  %v1406 = vsel %vm781, %v1232, %v702
  %v1407 = vsel %vm781, %v1236, %v707
  %v1408 = vsel %vm781, %v1240, %v712
  %v1409 = vsel %vm781, %v1244, %v717
  %v1410 = vsel %vm781, %v1248, %v722
  %v1411 = vsel %vm781, %v1252, %v727
  %v1412 = vsel %vm781, %v1256, %v732
  %v1413 = vsel %vm781, %v1260, %v737
  %v1414 = vsel %vm781, %v1264, %v742
  %v1415 = vsel %vm781, %v1268, %v747
  %v1416 = vsel %vm781, %v1272, %v752
  %v1417 = vsel %vm781, %v1276, %v757
  %v1418 = vsel %vm781, %v1280, %v762
  %v1419 = vsel %vm781, %v1284, %v767
  %v1420 = vsel %vm781, %v1288, %v772
  %v1421 = vsel %vm781, %v1292, %v777
  %v1422 = vld [vmem:[%s1] sm:$0x1]
  %v1423 = vlaneseq
  %v1424 = vshrl.u32 %v1423, 7
  %v1425 = vsub.s32 0, %v1424
  %v1426 = vrot.slane %v1422, %v1425
  %v1427 = vsub.f32 %v1294, %v1426
  %v1428 = vsub.f32 %v1295, %v1426
  %v1429 = vsub.f32 %v1296, %v1426
  %v1430 = vsub.f32 %v1297, %v1426
  %v1431 = vsub.f32 %v1298, %v1426
  %v1432 = vsub.f32 %v1299, %v1426
  %v1433 = vsub.f32 %v1300, %v1426
  %v1434 = vsub.f32 %v1301, %v1426
  %v1435 = vsub.f32 %v1302, %v1426
  %v1436 = vsub.f32 %v1303, %v1426
  %v1437 = vsub.f32 %v1304, %v1426
  %v1438 = vsub.f32 %v1305, %v1426
  %v1439 = vsub.f32 %v1306, %v1426
  %v1440 = vsub.f32 %v1307, %v1426
  %v1441 = vsub.f32 %v1308, %v1426
  %v1442 = vsub.f32 %v1309, %v1426
  %v1443 = vsub.f32 %v1310, %v1426
  %v1444 = vsub.f32 %v1311, %v1426
  %v1445 = vsub.f32 %v1312, %v1426
  %v1446 = vsub.f32 %v1313, %v1426
  %v1447 = vsub.f32 %v1314, %v1426
  %v1448 = vsub.f32 %v1315, %v1426
  %v1449 = vsub.f32 %v1316, %v1426
  %v1450 = vsub.f32 %v1317, %v1426
  %v1451 = vsub.f32 %v1318, %v1426
  %v1452 = vsub.f32 %v1319, %v1426
  %v1453 = vsub.f32 %v1320, %v1426
  %v1454 = vsub.f32 %v1321, %v1426
  %v1455 = vsub.f32 %v1322, %v1426
  %v1456 = vsub.f32 %v1323, %v1426
  %v1457 = vsub.f32 %v1324, %v1426
  %v1458 = vsub.f32 %v1325, %v1426
  %v1459 = vsub.f32 %v1326, %v1426
  %v1460 = vsub.f32 %v1327, %v1426
  %v1461 = vsub.f32 %v1328, %v1426
  %v1462 = vsub.f32 %v1329, %v1426
  %v1463 = vsub.f32 %v1330, %v1426
  %v1464 = vsub.f32 %v1331, %v1426
  %v1465 = vsub.f32 %v1332, %v1426
  %v1466 = vsub.f32 %v1333, %v1426
  %v1467 = vsub.f32 %v1334, %v1426
  %v1468 = vsub.f32 %v1335, %v1426
  %v1469 = vsub.f32 %v1336, %v1426
  %v1470 = vsub.f32 %v1337, %v1426
  %v1471 = vsub.f32 %v1338, %v1426
  %v1472 = vsub.f32 %v1339, %v1426
  %v1473 = vsub.f32 %v1340, %v1426
  %v1474 = vsub.f32 %v1341, %v1426
  %v1475 = vsub.f32 %v1342, %v1426
  %v1476 = vsub.f32 %v1343, %v1426
  %v1477 = vsub.f32 %v1344, %v1426
  %v1478 = vsub.f32 %v1345, %v1426
  %v1479 = vsub.f32 %v1346, %v1426
  %v1480 = vsub.f32 %v1347, %v1426
  %v1481 = vsub.f32 %v1348, %v1426
  %v1482 = vsub.f32 %v1349, %v1426
  %v1483 = vsub.f32 %v1350, %v1426
  %v1484 = vsub.f32 %v1351, %v1426
  %v1485 = vsub.f32 %v1352, %v1426
  %v1486 = vsub.f32 %v1353, %v1426
  %v1487 = vsub.f32 %v1354, %v1426
  %v1488 = vsub.f32 %v1355, %v1426
  %v1489 = vsub.f32 %v1356, %v1426
  %v1490 = vsub.f32 %v1357, %v1426
  %v1491 = vsub.f32 %v1358, %v1426
  %v1492 = vsub.f32 %v1359, %v1426
  %v1493 = vsub.f32 %v1360, %v1426
  %v1494 = vsub.f32 %v1361, %v1426
  %v1495 = vsub.f32 %v1362, %v1426
  %v1496 = vsub.f32 %v1363, %v1426
  %v1497 = vsub.f32 %v1364, %v1426
  %v1498 = vsub.f32 %v1365, %v1426
  %v1499 = vsub.f32 %v1366, %v1426
  %v1500 = vsub.f32 %v1367, %v1426
  %v1501 = vsub.f32 %v1368, %v1426
  %v1502 = vsub.f32 %v1369, %v1426
  %v1503 = vsub.f32 %v1370, %v1426
  %v1504 = vsub.f32 %v1371, %v1426
  %v1505 = vsub.f32 %v1372, %v1426
  %v1506 = vsub.f32 %v1373, %v1426
  %v1507 = vsub.f32 %v1374, %v1426
  %v1508 = vsub.f32 %v1375, %v1426
  %v1509 = vsub.f32 %v1376, %v1426
  %v1510 = vsub.f32 %v1377, %v1426
  %v1511 = vsub.f32 %v1378, %v1426
  %v1512 = vsub.f32 %v1379, %v1426
  %v1513 = vsub.f32 %v1380, %v1426
  %v1514 = vsub.f32 %v1381, %v1426
  %v1515 = vsub.f32 %v1382, %v1426
  %v1516 = vsub.f32 %v1383, %v1426
  %v1517 = vsub.f32 %v1384, %v1426
  %v1518 = vsub.f32 %v1385, %v1426
  %v1519 = vsub.f32 %v1386, %v1426
  %v1520 = vsub.f32 %v1387, %v1426
  %v1521 = vsub.f32 %v1388, %v1426
  %v1522 = vsub.f32 %v1389, %v1426
  %v1523 = vsub.f32 %v1390, %v1426
  %v1524 = vsub.f32 %v1391, %v1426
  %v1525 = vsub.f32 %v1392, %v1426
  %v1526 = vsub.f32 %v1393, %v1426
  %v1527 = vsub.f32 %v1394, %v1426
  %v1528 = vsub.f32 %v1395, %v1426
  %v1529 = vsub.f32 %v1396, %v1426
  %v1530 = vsub.f32 %v1397, %v1426
  %v1531 = vsub.f32 %v1398, %v1426
  %v1532 = vsub.f32 %v1399, %v1426
  %v1533 = vsub.f32 %v1400, %v1426
  %v1534 = vsub.f32 %v1401, %v1426
  %v1535 = vsub.f32 %v1402, %v1426
  %v1536 = vsub.f32 %v1403, %v1426
  %v1537 = vsub.f32 %v1404, %v1426
  %v1538 = vsub.f32 %v1405, %v1426
  %v1539 = vsub.f32 %v1406, %v1426
  %v1540 = vsub.f32 %v1407, %v1426
  %v1541 = vsub.f32 %v1408, %v1426
  %v1542 = vsub.f32 %v1409, %v1426
  %v1543 = vsub.f32 %v1410, %v1426
  %v1544 = vsub.f32 %v1411, %v1426
  %v1545 = vsub.f32 %v1412, %v1426
  %v1546 = vsub.f32 %v1413, %v1426
  %v1547 = vsub.f32 %v1414, %v1426
  %v1548 = vsub.f32 %v1415, %v1426
  %v1549 = vsub.f32 %v1416, %v1426
  %v1550 = vsub.f32 %v1417, %v1426
  %v1551 = vsub.f32 %v1418, %v1426
  %v1552 = vsub.f32 %v1419, %v1426
  %v1553 = vsub.f32 %v1420, %v1426
  %v1554 = vsub.f32 %v1421, %v1426
  %v1555 = vld [vmem:[%s1 + $0x1] sm:$0x1]
  %v1556 = vmul.f32 %v1427, %v1427
  %v1557 = vmul.f32 %v1428, %v1428
  %v1558 = vmul.f32 %v1429, %v1429
  %v1559 = vmul.f32 %v1430, %v1430
  %v1560 = vmul.f32 %v1431, %v1431
  %v1561 = vmul.f32 %v1432, %v1432
  %v1562 = vmul.f32 %v1433, %v1433
  %v1563 = vmul.f32 %v1434, %v1434
  %v1564 = vmul.f32 %v1435, %v1435
  %v1565 = vmul.f32 %v1436, %v1436
  %v1566 = vmul.f32 %v1437, %v1437
  %v1567 = vmul.f32 %v1438, %v1438
  %v1568 = vmul.f32 %v1439, %v1439
  %v1569 = vmul.f32 %v1440, %v1440
  %v1570 = vmul.f32 %v1441, %v1441
  %v1571 = vmul.f32 %v1442, %v1442
  %v1572 = vmul.f32 %v1443, %v1443
  %v1573 = vmul.f32 %v1444, %v1444
  %v1574 = vmul.f32 %v1445, %v1445
  %v1575 = vmul.f32 %v1446, %v1446
  %v1576 = vmul.f32 %v1447, %v1447
  %v1577 = vmul.f32 %v1448, %v1448
  %v1578 = vmul.f32 %v1449, %v1449
  %v1579 = vmul.f32 %v1450, %v1450
  %v1580 = vmul.f32 %v1451, %v1451
  %v1581 = vmul.f32 %v1452, %v1452
  %v1582 = vmul.f32 %v1453, %v1453
  %v1583 = vmul.f32 %v1454, %v1454
  %v1584 = vmul.f32 %v1455, %v1455
  %v1585 = vmul.f32 %v1456, %v1456
  %v1586 = vmul.f32 %v1457, %v1457
  %v1587 = vmul.f32 %v1458, %v1458
  %v1588 = vmul.f32 %v1459, %v1459
  %v1589 = vmul.f32 %v1460, %v1460
  %v1590 = vmul.f32 %v1461, %v1461
  %v1591 = vmul.f32 %v1462, %v1462
  %v1592 = vmul.f32 %v1463, %v1463
  %v1593 = vmul.f32 %v1464, %v1464
  %v1594 = vmul.f32 %v1465, %v1465
  %v1595 = vmul.f32 %v1466, %v1466
  %v1596 = vmul.f32 %v1467, %v1467
  %v1597 = vmul.f32 %v1468, %v1468
  %v1598 = vmul.f32 %v1469, %v1469
  %v1599 = vmul.f32 %v1470, %v1470
  %v1600 = vmul.f32 %v1471, %v1471
  %v1601 = vmul.f32 %v1472, %v1472
  %v1602 = vmul.f32 %v1473, %v1473
  %v1603 = vmul.f32 %v1474, %v1474
  %v1604 = vmul.f32 %v1475, %v1475
  %v1605 = vmul.f32 %v1476, %v1476
  %v1606 = vmul.f32 %v1477, %v1477
  %v1607 = vmul.f32 %v1478, %v1478
  %v1608 = vmul.f32 %v1479, %v1479
  %v1609 = vmul.f32 %v1480, %v1480
  %v1610 = vmul.f32 %v1481, %v1481
  %v1611 = vmul.f32 %v1482, %v1482
  %v1612 = vmul.f32 %v1483, %v1483
  %v1613 = vmul.f32 %v1484, %v1484
  %v1614 = vmul.f32 %v1485, %v1485
  %v1615 = vmul.f32 %v1486, %v1486
  %v1616 = vmul.f32 %v1487, %v1487
  %v1617 = vmul.f32 %v1488, %v1488
  %v1618 = vmul.f32 %v1489, %v1489
  %v1619 = vmul.f32 %v1490, %v1490
  %v1620 = vmul.f32 %v1491, %v1491
  %v1621 = vmul.f32 %v1492, %v1492
  %v1622 = vmul.f32 %v1493, %v1493
  %v1623 = vmul.f32 %v1494, %v1494
  %v1624 = vmul.f32 %v1495, %v1495
  %v1625 = vmul.f32 %v1496, %v1496
  %v1626 = vmul.f32 %v1497, %v1497
  %v1627 = vmul.f32 %v1498, %v1498
  %v1628 = vmul.f32 %v1499, %v1499
  %v1629 = vmul.f32 %v1500, %v1500
  %v1630 = vmul.f32 %v1501, %v1501
  %v1631 = vmul.f32 %v1502, %v1502
  %v1632 = vmul.f32 %v1503, %v1503
  %v1633 = vmul.f32 %v1504, %v1504
  %v1634 = vmul.f32 %v1505, %v1505
  %v1635 = vmul.f32 %v1506, %v1506
  %v1636 = vmul.f32 %v1507, %v1507
  %v1637 = vmul.f32 %v1508, %v1508
  %v1638 = vmul.f32 %v1509, %v1509
  %v1639 = vmul.f32 %v1510, %v1510
  %v1640 = vmul.f32 %v1511, %v1511
  %v1641 = vmul.f32 %v1512, %v1512
  %v1642 = vmul.f32 %v1513, %v1513
  %v1643 = vmul.f32 %v1514, %v1514
  %v1644 = vmul.f32 %v1515, %v1515
  %v1645 = vmul.f32 %v1516, %v1516
  %v1646 = vmul.f32 %v1517, %v1517
  %v1647 = vmul.f32 %v1518, %v1518
  %v1648 = vmul.f32 %v1519, %v1519
  %v1649 = vmul.f32 %v1520, %v1520
  %v1650 = vmul.f32 %v1521, %v1521
  %v1651 = vmul.f32 %v1522, %v1522
  %v1652 = vmul.f32 %v1523, %v1523
  %v1653 = vmul.f32 %v1524, %v1524
  %v1654 = vmul.f32 %v1525, %v1525
  %v1655 = vmul.f32 %v1526, %v1526
  %v1656 = vmul.f32 %v1527, %v1527
  %v1657 = vmul.f32 %v1528, %v1528
  %v1658 = vmul.f32 %v1529, %v1529
  %v1659 = vmul.f32 %v1530, %v1530
  %v1660 = vmul.f32 %v1531, %v1531
  %v1661 = vmul.f32 %v1532, %v1532
  %v1662 = vmul.f32 %v1533, %v1533
  %v1663 = vmul.f32 %v1534, %v1534
  %v1664 = vmul.f32 %v1535, %v1535
  %v1665 = vmul.f32 %v1536, %v1536
  %v1666 = vmul.f32 %v1537, %v1537
  %v1667 = vmul.f32 %v1538, %v1538
  %v1668 = vmul.f32 %v1539, %v1539
  %v1669 = vmul.f32 %v1540, %v1540
  %v1670 = vmul.f32 %v1541, %v1541
  %v1671 = vmul.f32 %v1542, %v1542
  %v1672 = vmul.f32 %v1543, %v1543
  %v1673 = vmul.f32 %v1544, %v1544
  %v1674 = vmul.f32 %v1545, %v1545
  %v1675 = vmul.f32 %v1546, %v1546
  %v1676 = vmul.f32 %v1547, %v1547
  %v1677 = vmul.f32 %v1548, %v1548
  %v1678 = vmul.f32 %v1549, %v1549
  %v1679 = vmul.f32 %v1550, %v1550
  %v1680 = vmul.f32 %v1551, %v1551
  %v1681 = vmul.f32 %v1552, %v1552
  %v1682 = vmul.f32 %v1553, %v1553
  %v1683 = vmul.f32 %v1554, %v1554
  %v1684 = vlaneseq
  %v1685 = vshrl.u32 %v1684, 7
  %v1686 = vsub.s32 0, %v1685
  %v1687 = vrot.slane %v1555, %v1686
  %v1688 = vmul.f32 %v1687, %v1556
  %v1689 = vmul.f32 %v1687, %v1557
  %v1690 = vmul.f32 %v1687, %v1558
  %v1691 = vmul.f32 %v1687, %v1559
  %v1692 = vmul.f32 %v1687, %v1560
  %v1693 = vmul.f32 %v1687, %v1561
  %v1694 = vmul.f32 %v1687, %v1562
  %v1695 = vmul.f32 %v1687, %v1563
  %v1696 = vmul.f32 %v1687, %v1564
  %v1697 = vmul.f32 %v1687, %v1565
  %v1698 = vmul.f32 %v1687, %v1566
  %v1699 = vmul.f32 %v1687, %v1567
  %v1700 = vmul.f32 %v1687, %v1568
  %v1701 = vmul.f32 %v1687, %v1569
  %v1702 = vmul.f32 %v1687, %v1570
  %v1703 = vmul.f32 %v1687, %v1571
  %v1704 = vmul.f32 %v1687, %v1572
  %v1705 = vmul.f32 %v1687, %v1573
  %v1706 = vmul.f32 %v1687, %v1574
  %v1707 = vmul.f32 %v1687, %v1575
  %v1708 = vmul.f32 %v1687, %v1576
  %v1709 = vmul.f32 %v1687, %v1577
  %v1710 = vmul.f32 %v1687, %v1578
  %v1711 = vmul.f32 %v1687, %v1579
  %v1712 = vmul.f32 %v1687, %v1580
  %v1713 = vmul.f32 %v1687, %v1581
  %v1714 = vmul.f32 %v1687, %v1582
  %v1715 = vmul.f32 %v1687, %v1583
  %v1716 = vmul.f32 %v1687, %v1584
  %v1717 = vmul.f32 %v1687, %v1585
  %v1718 = vmul.f32 %v1687, %v1586
  %v1719 = vmul.f32 %v1687, %v1587
  %v1720 = vmul.f32 %v1687, %v1588
  %v1721 = vmul.f32 %v1687, %v1589
  %v1722 = vmul.f32 %v1687, %v1590
  %v1723 = vmul.f32 %v1687, %v1591
  %v1724 = vmul.f32 %v1687, %v1592
  %v1725 = vmul.f32 %v1687, %v1593
  %v1726 = vmul.f32 %v1687, %v1594
  %v1727 = vmul.f32 %v1687, %v1595
  %v1728 = vmul.f32 %v1687, %v1596
  %v1729 = vmul.f32 %v1687, %v1597
  %v1730 = vmul.f32 %v1687, %v1598
  %v1731 = vmul.f32 %v1687, %v1599
  %v1732 = vmul.f32 %v1687, %v1600
  %v1733 = vmul.f32 %v1687, %v1601
  %v1734 = vmul.f32 %v1687, %v1602
  %v1735 = vmul.f32 %v1687, %v1603
  %v1736 = vmul.f32 %v1687, %v1604
  %v1737 = vmul.f32 %v1687, %v1605
  %v1738 = vmul.f32 %v1687, %v1606
  %v1739 = vmul.f32 %v1687, %v1607
  %v1740 = vmul.f32 %v1687, %v1608
  %v1741 = vmul.f32 %v1687, %v1609
  %v1742 = vmul.f32 %v1687, %v1610
  %v1743 = vmul.f32 %v1687, %v1611
  %v1744 = vmul.f32 %v1687, %v1612
  %v1745 = vmul.f32 %v1687, %v1613
  %v1746 = vmul.f32 %v1687, %v1614
  %v1747 = vmul.f32 %v1687, %v1615
  %v1748 = vmul.f32 %v1687, %v1616
  %v1749 = vmul.f32 %v1687, %v1617
  %v1750 = vmul.f32 %v1687, %v1618
  %v1751 = vmul.f32 %v1687, %v1619
  %v1752 = vmul.f32 %v1687, %v1620
  %v1753 = vmul.f32 %v1687, %v1621
  %v1754 = vmul.f32 %v1687, %v1622
  %v1755 = vmul.f32 %v1687, %v1623
  %v1756 = vmul.f32 %v1687, %v1624
  %v1757 = vmul.f32 %v1687, %v1625
  %v1758 = vmul.f32 %v1687, %v1626
  %v1759 = vmul.f32 %v1687, %v1627
  %v1760 = vmul.f32 %v1687, %v1628
  %v1761 = vmul.f32 %v1687, %v1629
  %v1762 = vmul.f32 %v1687, %v1630
  %v1763 = vmul.f32 %v1687, %v1631
  %v1764 = vmul.f32 %v1687, %v1632
  %v1765 = vmul.f32 %v1687, %v1633
  %v1766 = vmul.f32 %v1687, %v1634
  %v1767 = vmul.f32 %v1687, %v1635
  %v1768 = vmul.f32 %v1687, %v1636
  %v1769 = vmul.f32 %v1687, %v1637
  %v1770 = vmul.f32 %v1687, %v1638
  %v1771 = vmul.f32 %v1687, %v1639
  %v1772 = vmul.f32 %v1687, %v1640
  %v1773 = vmul.f32 %v1687, %v1641
  %v1774 = vmul.f32 %v1687, %v1642
  %v1775 = vmul.f32 %v1687, %v1643
  %v1776 = vmul.f32 %v1687, %v1644
  %v1777 = vmul.f32 %v1687, %v1645
  %v1778 = vmul.f32 %v1687, %v1646
  %v1779 = vmul.f32 %v1687, %v1647
  %v1780 = vmul.f32 %v1687, %v1648
  %v1781 = vmul.f32 %v1687, %v1649
  %v1782 = vmul.f32 %v1687, %v1650
  %v1783 = vmul.f32 %v1687, %v1651
  %v1784 = vmul.f32 %v1687, %v1652
  %v1785 = vmul.f32 %v1687, %v1653
  %v1786 = vmul.f32 %v1687, %v1654
  %v1787 = vmul.f32 %v1687, %v1655
  %v1788 = vmul.f32 %v1687, %v1656
  %v1789 = vmul.f32 %v1687, %v1657
  %v1790 = vmul.f32 %v1687, %v1658
  %v1791 = vmul.f32 %v1687, %v1659
  %v1792 = vmul.f32 %v1687, %v1660
  %v1793 = vmul.f32 %v1687, %v1661
  %v1794 = vmul.f32 %v1687, %v1662
  %v1795 = vmul.f32 %v1687, %v1663
  %v1796 = vmul.f32 %v1687, %v1664
  %v1797 = vmul.f32 %v1687, %v1665
  %v1798 = vmul.f32 %v1687, %v1666
  %v1799 = vmul.f32 %v1687, %v1667
  %v1800 = vmul.f32 %v1687, %v1668
  %v1801 = vmul.f32 %v1687, %v1669
  %v1802 = vmul.f32 %v1687, %v1670
  %v1803 = vmul.f32 %v1687, %v1671
  %v1804 = vmul.f32 %v1687, %v1672
  %v1805 = vmul.f32 %v1687, %v1673
  %v1806 = vmul.f32 %v1687, %v1674
  %v1807 = vmul.f32 %v1687, %v1675
  %v1808 = vmul.f32 %v1687, %v1676
  %v1809 = vmul.f32 %v1687, %v1677
  %v1810 = vmul.f32 %v1687, %v1678
  %v1811 = vmul.f32 %v1687, %v1679
  %v1812 = vmul.f32 %v1687, %v1680
  %v1813 = vmul.f32 %v1687, %v1681
  %v1814 = vmul.f32 %v1687, %v1682
  %v1815 = vmul.f32 %v1687, %v1683
  %v1816 = vmul.f32 %v1688, 1.442695
  %v1817 = vpow.pop %v1816
  %v1818 = vmul.f32 %v1689, 1.442695
  %v1819 = vpow.pop %v1818
  %v1820 = vmul.f32 %v1690, 1.442695
  %v1821 = vpow.pop %v1820
  %v1822 = vmul.f32 %v1691, 1.442695
  %v1823 = vpow.pop %v1822
  %v1824 = vmul.f32 %v1692, 1.442695
  %v1825 = vpow.pop %v1824
  %v1826 = vmul.f32 %v1693, 1.442695
  %v1827 = vpow.pop %v1826
  %v1828 = vmul.f32 %v1694, 1.442695
  %v1829 = vpow.pop %v1828
  %v1830 = vmul.f32 %v1695, 1.442695
  %v1831 = vpow.pop %v1830
  %v1832 = vmul.f32 %v1696, 1.442695
  %v1833 = vpow.pop %v1832
  %v1834 = vmul.f32 %v1697, 1.442695
  %v1835 = vpow.pop %v1834
  %v1836 = vmul.f32 %v1698, 1.442695
  %v1837 = vpow.pop %v1836
  %v1838 = vmul.f32 %v1699, 1.442695
  %v1839 = vpow.pop %v1838
  %v1840 = vmul.f32 %v1700, 1.442695
  %v1841 = vpow.pop %v1840
  %v1842 = vmul.f32 %v1701, 1.442695
  %v1843 = vpow.pop %v1842
  %v1844 = vmul.f32 %v1702, 1.442695
  %v1845 = vpow.pop %v1844
  %v1846 = vmul.f32 %v1703, 1.442695
  %v1847 = vpow.pop %v1846
  %v1848 = vmul.f32 %v1704, 1.442695
  %v1849 = vpow.pop %v1848
  %v1850 = vmul.f32 %v1705, 1.442695
  %v1851 = vpow.pop %v1850
  %v1852 = vmul.f32 %v1706, 1.442695
  %v1853 = vpow.pop %v1852
  %v1854 = vmul.f32 %v1707, 1.442695
  %v1855 = vpow.pop %v1854
  %v1856 = vmul.f32 %v1708, 1.442695
  %v1857 = vpow.pop %v1856
  %v1858 = vmul.f32 %v1709, 1.442695
  %v1859 = vpow.pop %v1858
  %v1860 = vmul.f32 %v1710, 1.442695
  %v1861 = vpow.pop %v1860
  %v1862 = vmul.f32 %v1711, 1.442695
  %v1863 = vpow.pop %v1862
  %v1864 = vmul.f32 %v1712, 1.442695
  %v1865 = vpow.pop %v1864
  %v1866 = vmul.f32 %v1713, 1.442695
  %v1867 = vpow.pop %v1866
  %v1868 = vmul.f32 %v1714, 1.442695
  %v1869 = vpow.pop %v1868
  %v1870 = vmul.f32 %v1715, 1.442695
  %v1871 = vpow.pop %v1870
  %v1872 = vmul.f32 %v1716, 1.442695
  %v1873 = vpow.pop %v1872
  %v1874 = vmul.f32 %v1717, 1.442695
  %v1875 = vpow.pop %v1874
  %v1876 = vmul.f32 %v1718, 1.442695
  %v1877 = vpow.pop %v1876
  %v1878 = vmul.f32 %v1719, 1.442695
  %v1879 = vpow.pop %v1878
  %v1880 = vmul.f32 %v1720, 1.442695
  %v1881 = vpow.pop %v1880
  %v1882 = vmul.f32 %v1721, 1.442695
  %v1883 = vpow.pop %v1882
  %v1884 = vmul.f32 %v1722, 1.442695
  %v1885 = vpow.pop %v1884
  %v1886 = vmul.f32 %v1723, 1.442695
  %v1887 = vpow.pop %v1886
  %v1888 = vmul.f32 %v1724, 1.442695
  %v1889 = vpow.pop %v1888
  %v1890 = vmul.f32 %v1725, 1.442695
  %v1891 = vpow.pop %v1890
  %v1892 = vmul.f32 %v1726, 1.442695
  %v1893 = vpow.pop %v1892
  %v1894 = vmul.f32 %v1727, 1.442695
  %v1895 = vpow.pop %v1894
  %v1896 = vmul.f32 %v1728, 1.442695
  %v1897 = vpow.pop %v1896
  %v1898 = vmul.f32 %v1729, 1.442695
  %v1899 = vpow.pop %v1898
  %v1900 = vmul.f32 %v1730, 1.442695
  %v1901 = vpow.pop %v1900
  %v1902 = vmul.f32 %v1731, 1.442695
  %v1903 = vpow.pop %v1902
  %v1904 = vmul.f32 %v1732, 1.442695
  %v1905 = vpow.pop %v1904
  %v1906 = vmul.f32 %v1733, 1.442695
  %v1907 = vpow.pop %v1906
  %v1908 = vmul.f32 %v1734, 1.442695
  %v1909 = vpow.pop %v1908
  %v1910 = vmul.f32 %v1735, 1.442695
  %v1911 = vpow.pop %v1910
  %v1912 = vmul.f32 %v1736, 1.442695
  %v1913 = vpow.pop %v1912
  %v1914 = vmul.f32 %v1737, 1.442695
  %v1915 = vpow.pop %v1914
  %v1916 = vmul.f32 %v1738, 1.442695
  %v1917 = vpow.pop %v1916
  %v1918 = vmul.f32 %v1739, 1.442695
  %v1919 = vpow.pop %v1918
  %v1920 = vmul.f32 %v1740, 1.442695
  %v1921 = vpow.pop %v1920
  %v1922 = vmul.f32 %v1741, 1.442695
  %v1923 = vpow.pop %v1922
  %v1924 = vmul.f32 %v1742, 1.442695
  %v1925 = vpow.pop %v1924
  %v1926 = vmul.f32 %v1743, 1.442695
  %v1927 = vpow.pop %v1926
  %v1928 = vmul.f32 %v1744, 1.442695
  %v1929 = vpow.pop %v1928
  %v1930 = vmul.f32 %v1745, 1.442695
  %v1931 = vpow.pop %v1930
  %v1932 = vmul.f32 %v1746, 1.442695
  %v1933 = vpow.pop %v1932
  %v1934 = vmul.f32 %v1747, 1.442695
  %v1935 = vpow.pop %v1934
  %v1936 = vmul.f32 %v1748, 1.442695
  %v1937 = vpow.pop %v1936
  %v1938 = vmul.f32 %v1749, 1.442695
  %v1939 = vpow.pop %v1938
  %v1940 = vmul.f32 %v1750, 1.442695
  %v1941 = vpow.pop %v1940
  %v1942 = vmul.f32 %v1751, 1.442695
  %v1943 = vpow.pop %v1942
  %v1944 = vmul.f32 %v1752, 1.442695
  %v1945 = vpow.pop %v1944
  %v1946 = vmul.f32 %v1753, 1.442695
  %v1947 = vpow.pop %v1946
  %v1948 = vmul.f32 %v1754, 1.442695
  %v1949 = vpow.pop %v1948
  %v1950 = vmul.f32 %v1755, 1.442695
  %v1951 = vpow.pop %v1950
  %v1952 = vmul.f32 %v1756, 1.442695
  %v1953 = vpow.pop %v1952
  %v1954 = vmul.f32 %v1757, 1.442695
  %v1955 = vpow.pop %v1954
  %v1956 = vmul.f32 %v1758, 1.442695
  %v1957 = vpow.pop %v1956
  %v1958 = vmul.f32 %v1759, 1.442695
  %v1959 = vpow.pop %v1958
  %v1960 = vmul.f32 %v1760, 1.442695
  %v1961 = vpow.pop %v1960
  %v1962 = vmul.f32 %v1761, 1.442695
  %v1963 = vpow.pop %v1962
  %v1964 = vmul.f32 %v1762, 1.442695
  %v1965 = vpow.pop %v1964
  %v1966 = vmul.f32 %v1763, 1.442695
  %v1967 = vpow.pop %v1966
  %v1968 = vmul.f32 %v1764, 1.442695
  %v1969 = vpow.pop %v1968
  %v1970 = vmul.f32 %v1765, 1.442695
  %v1971 = vpow.pop %v1970
  %v1972 = vmul.f32 %v1766, 1.442695
  %v1973 = vpow.pop %v1972
  %v1974 = vmul.f32 %v1767, 1.442695
  %v1975 = vpow.pop %v1974
  %v1976 = vmul.f32 %v1768, 1.442695
  %v1977 = vpow.pop %v1976
  %v1978 = vmul.f32 %v1769, 1.442695
  %v1979 = vpow.pop %v1978
  %v1980 = vmul.f32 %v1770, 1.442695
  %v1981 = vpow.pop %v1980
  %v1982 = vmul.f32 %v1771, 1.442695
  %v1983 = vpow.pop %v1982
  %v1984 = vmul.f32 %v1772, 1.442695
  %v1985 = vpow.pop %v1984
  %v1986 = vmul.f32 %v1773, 1.442695
  %v1987 = vpow.pop %v1986
  %v1988 = vmul.f32 %v1774, 1.442695
  %v1989 = vpow.pop %v1988
  %v1990 = vmul.f32 %v1775, 1.442695
  %v1991 = vpow.pop %v1990
  %v1992 = vmul.f32 %v1776, 1.442695
  %v1993 = vpow.pop %v1992
  %v1994 = vmul.f32 %v1777, 1.442695
  %v1995 = vpow.pop %v1994
  %v1996 = vmul.f32 %v1778, 1.442695
  %v1997 = vpow.pop %v1996
  %v1998 = vmul.f32 %v1779, 1.442695
  %v1999 = vpow.pop %v1998
  %v2000 = vmul.f32 %v1780, 1.442695
  %v2001 = vpow.pop %v2000
  %v2002 = vmul.f32 %v1781, 1.442695
  %v2003 = vpow.pop %v2002
  %v2004 = vmul.f32 %v1782, 1.442695
  %v2005 = vpow.pop %v2004
  %v2006 = vmul.f32 %v1783, 1.442695
  %v2007 = vpow.pop %v2006
  %v2008 = vmul.f32 %v1784, 1.442695
  %v2009 = vpow.pop %v2008
  %v2010 = vmul.f32 %v1785, 1.442695
  %v2011 = vpow.pop %v2010
  %v2012 = vmul.f32 %v1786, 1.442695
  %v2013 = vpow.pop %v2012
  %v2014 = vmul.f32 %v1787, 1.442695
  %v2015 = vpow.pop %v2014
  %v2016 = vmul.f32 %v1788, 1.442695
  %v2017 = vpow.pop %v2016
  %v2018 = vmul.f32 %v1789, 1.442695
  %v2019 = vpow.pop %v2018
  %v2020 = vmul.f32 %v1790, 1.442695
  %v2021 = vpow.pop %v2020
  %v2022 = vmul.f32 %v1791, 1.442695
  %v2023 = vpow.pop %v2022
  %v2024 = vmul.f32 %v1792, 1.442695
  %v2025 = vpow.pop %v2024
  %v2026 = vmul.f32 %v1793, 1.442695
  %v2027 = vpow.pop %v2026
  %v2028 = vmul.f32 %v1794, 1.442695
  %v2029 = vpow.pop %v2028
  %v2030 = vmul.f32 %v1795, 1.442695
  %v2031 = vpow.pop %v2030
  %v2032 = vmul.f32 %v1796, 1.442695
  %v2033 = vpow.pop %v2032
  %v2034 = vmul.f32 %v1797, 1.442695
  %v2035 = vpow.pop %v2034
  %v2036 = vmul.f32 %v1798, 1.442695
  %v2037 = vpow.pop %v2036
  %v2038 = vmul.f32 %v1799, 1.442695
  %v2039 = vpow.pop %v2038
  %v2040 = vmul.f32 %v1800, 1.442695
  %v2041 = vpow.pop %v2040
  %v2042 = vmul.f32 %v1801, 1.442695
  %v2043 = vpow.pop %v2042
  %v2044 = vmul.f32 %v1802, 1.442695
  %v2045 = vpow.pop %v2044
  %v2046 = vmul.f32 %v1803, 1.442695
  %v2047 = vpow.pop %v2046
  %v2048 = vmul.f32 %v1804, 1.442695
  %v2049 = vpow.pop %v2048
  %v2050 = vmul.f32 %v1805, 1.442695
  %v2051 = vpow.pop %v2050
  %v2052 = vmul.f32 %v1806, 1.442695
  %v2053 = vpow.pop %v2052
  %v2054 = vmul.f32 %v1807, 1.442695
  %v2055 = vpow.pop %v2054
  %v2056 = vmul.f32 %v1808, 1.442695
  %v2057 = vpow.pop %v2056
  %v2058 = vmul.f32 %v1809, 1.442695
  %v2059 = vpow.pop %v2058
  %v2060 = vmul.f32 %v1810, 1.442695
  %v2061 = vpow.pop %v2060
  %v2062 = vmul.f32 %v1811, 1.442695
  %v2063 = vpow.pop %v2062
  %v2064 = vmul.f32 %v1812, 1.442695
  %v2065 = vpow.pop %v2064
  %v2066 = vmul.f32 %v1813, 1.442695
  %v2067 = vpow.pop %v2066
  %v2068 = vmul.f32 %v1814, 1.442695
  %v2069 = vpow.pop %v2068
  %v2070 = vmul.f32 %v1815, 1.442695
  %v2071 = vpow.pop %v2070
  %2072 = vst [vmem:[%s2] sm:$0xff] %v1817
  %2073 = vst [vmem:[%s2 + $0x8] sm:$0xff] %v1819
  %2074 = vst [vmem:[%s2 + $0x10] sm:$0xff] %v1821
  %2075 = vst [vmem:[%s2 + $0x18] sm:$0xff] %v1823
  %2076 = vst [vmem:[%s2 + $0x20] sm:$0xff] %v1825
  %2077 = vst [vmem:[%s2 + $0x28] sm:$0xff] %v1827
  %2078 = vst [vmem:[%s2 + $0x30] sm:$0xff] %v1829
  %2079 = vst [vmem:[%s2 + $0x38] sm:$0xff] %v1831
  %2080 = vst [vmem:[%s2 + $0x40] sm:$0xff] %v1833
  %2081 = vst [vmem:[%s2 + $0x48] sm:$0xff] %v1835
  %2082 = vst [vmem:[%s2 + $0x50] sm:$0xff] %v1837
  %2083 = vst [vmem:[%s2 + $0x58] sm:$0xff] %v1839
  %2084 = vst [vmem:[%s2 + $0x60] sm:$0xff] %v1841
  %2085 = vst [vmem:[%s2 + $0x68] sm:$0xff] %v1843
  %2086 = vst [vmem:[%s2 + $0x70] sm:$0xff] %v1845
  %2087 = vst [vmem:[%s2 + $0x78] sm:$0xff] %v1847
  %2088 = vst [vmem:[%s2 + $0x80] sm:$0xff] %v1849
  %2089 = vst [vmem:[%s2 + $0x88] sm:$0xff] %v1851
  %2090 = vst [vmem:[%s2 + $0x90] sm:$0xff] %v1853
  %2091 = vst [vmem:[%s2 + $0x98] sm:$0xff] %v1855
  %2092 = vst [vmem:[%s2 + $0xa0] sm:$0xff] %v1857
  %2093 = vst [vmem:[%s2 + $0xa8] sm:$0xff] %v1859
  %2094 = vst [vmem:[%s2 + $0xb0] sm:$0xff] %v1861
  %2095 = vst [vmem:[%s2 + $0xb8] sm:$0xff] %v1863
  %2096 = vst [vmem:[%s2 + $0xc0] sm:$0xff] %v1865
  %2097 = vst [vmem:[%s2 + $0xc8] sm:$0xff] %v1867
  %2098 = vst [vmem:[%s2 + $0xd0] sm:$0xff] %v1869
  %2099 = vst [vmem:[%s2 + $0xd8] sm:$0xff] %v1871
  %2100 = vst [vmem:[%s2 + $0xe0] sm:$0xff] %v1873
  %2101 = vst [vmem:[%s2 + $0xe8] sm:$0xff] %v1875
  %2102 = vst [vmem:[%s2 + $0xf0] sm:$0xff] %v1877
  %2103 = vst [vmem:[%s2 + $0xf8] sm:$0xff] %v1879
  %2104 = vst [vmem:[%s2 + $0x100] sm:$0xff] %v1881
  %2105 = vst [vmem:[%s2 + $0x108] sm:$0xff] %v1883
  %2106 = vst [vmem:[%s2 + $0x110] sm:$0xff] %v1885
  %2107 = vst [vmem:[%s2 + $0x118] sm:$0xff] %v1887
  %2108 = vst [vmem:[%s2 + $0x120] sm:$0xff] %v1889
  %2109 = vst [vmem:[%s2 + $0x128] sm:$0xff] %v1891
  %2110 = vst [vmem:[%s2 + $0x130] sm:$0xff] %v1893
  %2111 = vst [vmem:[%s2 + $0x138] sm:$0xff] %v1895
  %2112 = vst [vmem:[%s2 + $0x140] sm:$0xff] %v1897
  %2113 = vst [vmem:[%s2 + $0x148] sm:$0xff] %v1899
  %2114 = vst [vmem:[%s2 + $0x150] sm:$0xff] %v1901
  %2115 = vst [vmem:[%s2 + $0x158] sm:$0xff] %v1903
  %2116 = vst [vmem:[%s2 + $0x160] sm:$0xff] %v1905
  %2117 = vst [vmem:[%s2 + $0x168] sm:$0xff] %v1907
  %2118 = vst [vmem:[%s2 + $0x170] sm:$0xff] %v1909
  %2119 = vst [vmem:[%s2 + $0x178] sm:$0xff] %v1911
  %2120 = vst [vmem:[%s2 + $0x180] sm:$0xff] %v1913
  %2121 = vst [vmem:[%s2 + $0x188] sm:$0xff] %v1915
  %2122 = vst [vmem:[%s2 + $0x190] sm:$0xff] %v1917
  %2123 = vst [vmem:[%s2 + $0x198] sm:$0xff] %v1919
  %2124 = vst [vmem:[%s2 + $0x1a0] sm:$0xff] %v1921
  %2125 = vst [vmem:[%s2 + $0x1a8] sm:$0xff] %v1923
  %2126 = vst [vmem:[%s2 + $0x1b0] sm:$0xff] %v1925
  %2127 = vst [vmem:[%s2 + $0x1b8] sm:$0xff] %v1927
  %2128 = vst [vmem:[%s2 + $0x1c0] sm:$0xff] %v1929
  %2129 = vst [vmem:[%s2 + $0x1c8] sm:$0xff] %v1931
  %2130 = vst [vmem:[%s2 + $0x1d0] sm:$0xff] %v1933
  %2131 = vst [vmem:[%s2 + $0x1d8] sm:$0xff] %v1935
  %2132 = vst [vmem:[%s2 + $0x1e0] sm:$0xff] %v1937
  %2133 = vst [vmem:[%s2 + $0x1e8] sm:$0xff] %v1939
  %2134 = vst [vmem:[%s2 + $0x1f0] sm:$0xff] %v1941
  %2135 = vst [vmem:[%s2 + $0x1f8] sm:$0xff] %v1943
  %2136 = vst [vmem:[%s2 + $0x200] sm:$0xff] %v1945
  %2137 = vst [vmem:[%s2 + $0x208] sm:$0xff] %v1947
  %2138 = vst [vmem:[%s2 + $0x210] sm:$0xff] %v1949
  %2139 = vst [vmem:[%s2 + $0x218] sm:$0xff] %v1951
  %2140 = vst [vmem:[%s2 + $0x220] sm:$0xff] %v1953
  %2141 = vst [vmem:[%s2 + $0x228] sm:$0xff] %v1955
  %2142 = vst [vmem:[%s2 + $0x230] sm:$0xff] %v1957
  %2143 = vst [vmem:[%s2 + $0x238] sm:$0xff] %v1959
  %2144 = vst [vmem:[%s2 + $0x240] sm:$0xff] %v1961
  %2145 = vst [vmem:[%s2 + $0x248] sm:$0xff] %v1963
  %2146 = vst [vmem:[%s2 + $0x250] sm:$0xff] %v1965
  %2147 = vst [vmem:[%s2 + $0x258] sm:$0xff] %v1967
  %2148 = vst [vmem:[%s2 + $0x260] sm:$0xff] %v1969
  %2149 = vst [vmem:[%s2 + $0x268] sm:$0xff] %v1971
  %2150 = vst [vmem:[%s2 + $0x270] sm:$0xff] %v1973
  %2151 = vst [vmem:[%s2 + $0x278] sm:$0xff] %v1975
  %2152 = vst [vmem:[%s2 + $0x280] sm:$0xff] %v1977
  %2153 = vst [vmem:[%s2 + $0x288] sm:$0xff] %v1979
  %2154 = vst [vmem:[%s2 + $0x290] sm:$0xff] %v1981
  %2155 = vst [vmem:[%s2 + $0x298] sm:$0xff] %v1983
  %2156 = vst [vmem:[%s2 + $0x2a0] sm:$0xff] %v1985
  %2157 = vst [vmem:[%s2 + $0x2a8] sm:$0xff] %v1987
  %2158 = vst [vmem:[%s2 + $0x2b0] sm:$0xff] %v1989
  %2159 = vst [vmem:[%s2 + $0x2b8] sm:$0xff] %v1991
  %2160 = vst [vmem:[%s2 + $0x2c0] sm:$0xff] %v1993
  %2161 = vst [vmem:[%s2 + $0x2c8] sm:$0xff] %v1995
  %2162 = vst [vmem:[%s2 + $0x2d0] sm:$0xff] %v1997
  %2163 = vst [vmem:[%s2 + $0x2d8] sm:$0xff] %v1999
  %2164 = vst [vmem:[%s2 + $0x2e0] sm:$0xff] %v2001
  %2165 = vst [vmem:[%s2 + $0x2e8] sm:$0xff] %v2003
  %2166 = vst [vmem:[%s2 + $0x2f0] sm:$0xff] %v2005
  %2167 = vst [vmem:[%s2 + $0x2f8] sm:$0xff] %v2007
  %2168 = vst [vmem:[%s2 + $0x300] sm:$0xff] %v2009
  %2169 = vst [vmem:[%s2 + $0x308] sm:$0xff] %v2011
  %2170 = vst [vmem:[%s2 + $0x310] sm:$0xff] %v2013
  %2171 = vst [vmem:[%s2 + $0x318] sm:$0xff] %v2015
  %2172 = vst [vmem:[%s2 + $0x320] sm:$0xff] %v2017
  %2173 = vst [vmem:[%s2 + $0x328] sm:$0xff] %v2019
  %2174 = vst [vmem:[%s2 + $0x330] sm:$0xff] %v2021
  %2175 = vst [vmem:[%s2 + $0x338] sm:$0xff] %v2023
  %2176 = vst [vmem:[%s2 + $0x340] sm:$0xff] %v2025
  %2177 = vst [vmem:[%s2 + $0x348] sm:$0xff] %v2027
  %2178 = vst [vmem:[%s2 + $0x350] sm:$0xff] %v2029
  %2179 = vst [vmem:[%s2 + $0x358] sm:$0xff] %v2031
  %2180 = vst [vmem:[%s2 + $0x360] sm:$0xff] %v2033
  %2181 = vst [vmem:[%s2 + $0x368] sm:$0xff] %v2035
  %2182 = vst [vmem:[%s2 + $0x370] sm:$0xff] %v2037
  %2183 = vst [vmem:[%s2 + $0x378] sm:$0xff] %v2039
  %2184 = vst [vmem:[%s2 + $0x380] sm:$0xff] %v2041
  %2185 = vst [vmem:[%s2 + $0x388] sm:$0xff] %v2043
  %2186 = vst [vmem:[%s2 + $0x390] sm:$0xff] %v2045
  %2187 = vst [vmem:[%s2 + $0x398] sm:$0xff] %v2047
  %2188 = vst [vmem:[%s2 + $0x3a0] sm:$0xff] %v2049
  %2189 = vst [vmem:[%s2 + $0x3a8] sm:$0xff] %v2051
  %2190 = vst [vmem:[%s2 + $0x3b0] sm:$0xff] %v2053
  %2191 = vst [vmem:[%s2 + $0x3b8] sm:$0xff] %v2055
  %2192 = vst [vmem:[%s2 + $0x3c0] sm:$0xff] %v2057
  %2193 = vst [vmem:[%s2 + $0x3c8] sm:$0xff] %v2059
  %2194 = vst [vmem:[%s2 + $0x3d0] sm:$0xff] %v2061
  %2195 = vst [vmem:[%s2 + $0x3d8] sm:$0xff] %v2063
  %2196 = vst [vmem:[%s2 + $0x3e0] sm:$0xff] %v2065
  %2197 = vst [vmem:[%s2 + $0x3e8] sm:$0xff] %v2067
  %2198 = vst [vmem:[%s2 + $0x3f0] sm:$0xff] %v2069
  %2199 = vst [vmem:[%s2 + $0x3f8] sm:$0xff] %v2071
  // Predicated region
  $region10: #{rbf_forward.1} parent=0 // pred_check
    _
  $region11: #{rbf_forward.1} parent=0 // pred_check_branch
    %2201 = sbr.rel (0) target = $region13
  $region12: #{rbf_forward.1} parent=0 // pred_region
    _
  $region13: #{rbf_forward.1} parent=0 // pred_fallthru
    _
  // Predicated region
  $region14: #{rbf_forward.1} parent=0 // pred_check
    _
  $region15: #{rbf_forward.1} parent=0 // pred_check_branch
    %2203 = sbr.rel (0) target = $region17
  $region16: #{rbf_forward.1} parent=0 // pred_region
    _
  $region17: #{rbf_forward.1} parent=0 // pred_fallthru
    _

</llo_original>
